<compile_context>
chip_gen: v6e
topology: v6e:2x2x1
jax: 0.10.0
libtpu: 0.0.40
codegen_flags: <defaults>
</compile_context>

<pallas_src>
import functools

import jax
import jax.numpy as jnp
from jax.experimental import pallas as pl
from jax.experimental.pallas import tpu as pltpu


def _tucker_kernel(e_ref, r_ref, w2_ref, bn0s_ref, bn0b_ref,
                   bn1s_ref, bn1b_ref, et_ref, out_ref, x_sc,
                   *, r_dim, dim):
    # Compute the TuckER core output for this batch tile once (first entity
    # tile); it stays resident in VMEM scratch for all subsequent j steps.
    @pl.when(pl.program_id(1) == 0)
    def _():
        # BN0 (eval) folded to scale/shift.
        x0 = e_ref[...] * bn0s_ref[...] + bn0b_ref[...]              # (tb, dim)
        # Core tensor contraction as a single wide MXU matmul:
        #   t[b, k*dim + d] = sum_i x0[b, i] * W[k, i, d]
        t = jnp.dot(x0, w2_ref[...],
                    preferred_element_type=jnp.float32)              # (tb, r_dim*dim)
        r = r_ref[...]                                               # (tb, r_dim)
        # acc[b, d] = sum_k r[b, k] * t[b, k*dim + d]   (VPU weighted sum)
        acc = r[:, 0:1] * t[:, 0:dim]
        for k in range(1, r_dim):
            acc = acc + r[:, k:k + 1] * t[:, k * dim:(k + 1) * dim]
        # BN1 (eval) folded to scale/shift.
        x_sc[...] = acc * bn1s_ref[...] + bn1b_ref[...]

    # Score against this tile of the entity table (lane-dense output block).
    logits = jnp.dot(x_sc[...], et_ref[...],
                     preferred_element_type=jnp.float32)             # (tb, tn)
    out_ref[...] = 1.0 / (1.0 + jnp.exp(-logits))


def tucker_forward(batch_inputs, params, *, tb=None, tn=None, eps=1e-5):
    """batch_inputs: (B, >=2) int32 [head, relation, ...] -> (B, N_ent) f32."""
    E = params["entity_emb"]                      # (N_ent, dim)
    R = params["rel_emb"]                         # (2*N_rel, r_dim)
    W = params["W"]                               # (r_dim, dim, dim)
    N_ent, dim = E.shape
    r_dim = R.shape[1]
    B = batch_inputs.shape[0]

    if tb is None:
        tb = B if B <= 256 else 256
    if tn is None:
        tn = N_ent if N_ent <= 1024 else 1024
    assert B % tb == 0 and (tb % 8 == 0 or tb == B)
    assert N_ent % tn == 0 and (tn % 128 == 0 or tn == N_ent)

    # Eval-mode BatchNorm folded into per-feature scale/shift.
    bn0_s = params["bn0_gamma"] / jnp.sqrt(params["bn0_var"] + eps)
    bn0_b = params["bn0_beta"] - params["bn0_mean"] * bn0_s
    bn1_s = params["bn1_gamma"] / jnp.sqrt(params["bn1_var"] + eps)
    bn1_b = params["bn1_beta"] - params["bn1_mean"] * bn1_s

    # Embedding gathers are glue; the heavy math runs in the kernel.
    head = batch_inputs[:, 0]
    rel = batch_inputs[:, 1]
    e = E[head]                                   # (B, dim)
    r = R[rel]                                    # (B, r_dim)

    # W2[i, k*dim + d] = W[k, i, d]  -> core contraction becomes one matmul.
    w2 = jnp.transpose(W, (1, 0, 2)).reshape(dim, r_dim * dim)
    et = E.T                                      # (dim, N_ent), lane-dense RHS

    grid = (B // tb, N_ent // tn)
    kern = functools.partial(_tucker_kernel, r_dim=r_dim, dim=dim)

    bn_spec = pl.BlockSpec((1, dim), lambda i, j: (0, 0))

    return pl.pallas_call(
        kern,
        out_shape=jax.ShapeDtypeStruct((B, N_ent), jnp.float32),
        grid=grid,
        in_specs=[
            pl.BlockSpec((tb, dim), lambda i, j: (i, 0)),            # e
            pl.BlockSpec((tb, r_dim), lambda i, j: (i, 0)),          # r
            pl.BlockSpec((dim, r_dim * dim), lambda i, j: (0, 0)),   # W2 (resident)
            bn_spec, bn_spec,                                        # bn0 scale/shift
            bn_spec, bn_spec,                                        # bn1 scale/shift
            pl.BlockSpec((dim, tn), lambda i, j: (0, j)),            # E^T tile
        ],
        out_specs=pl.BlockSpec((tb, tn), lambda i, j: (i, j)),
        scratch_shapes=[pltpu.VMEM((tb, dim), jnp.float32)],
        compiler_params=pltpu.CompilerParams(
            dimension_semantics=("parallel", "arbitrary"),
            vmem_limit_bytes=64 << 20),
    )(e, r, w2,
      bn0_s.reshape(1, dim), bn0_b.reshape(1, dim),
      bn1_s.reshape(1, dim), bn1_b.reshape(1, dim),
      et)


def reference_forward(batch_inputs, params, eps=1e-5):
    """Plain-JAX reimplementation of the PyTorch forward (eval mode, lookup=None)."""
    E = params["entity_emb"]
    R = params["rel_emb"]
    W = params["W"]
    r_dim, dim, _ = W.shape
    head = batch_inputs[:, 0]
    rel = batch_inputs[:, 1]
    e = E[head]
    r = R[rel]
    x = ((e - params["bn0_mean"]) / jnp.sqrt(params["bn0_var"] + eps)
         * params["bn0_gamma"] + params["bn0_beta"])
    w_mat = (r @ W.reshape(r_dim, dim * dim)).reshape(-1, dim, dim)
    x = jnp.einsum("bi,bid->bd", x, w_mat)
    x = ((x - params["bn1_mean"]) / jnp.sqrt(params["bn1_var"] + eps)
         * params["bn1_gamma"] + params["bn1_beta"])
    logits = x @ E.T
    return jax.nn.sigmoid(logits)


if __name__ == "__main__":
    # Small, module-consistent shapes: dim=128, r_dim=32, 256 entities, 8 relations.
    N_ENT, N_REL = 256, 8
    DIM, R_DIM = 128, 32
    B = 16

    key = jax.random.PRNGKey(0)
    ks = jax.random.split(key, 12)
    params = {
        "entity_emb": 0.5 * jax.random.normal(ks[0], (N_ENT, DIM), jnp.float32),
        # relation table has 2 * n_relations rows (forward/inverse), as in the module
        "rel_emb":    jax.random.normal(ks[1], (2 * N_REL, R_DIM), jnp.float32),
        # TuckER core tensor (r_dim, dim, dim)
        "W":          0.02 * jax.random.normal(ks[2], (R_DIM, DIM, DIM), jnp.float32),
        # BatchNorm1d(dim) running stats + affine (eval mode)
        "bn0_gamma":  1.0 + 0.1 * jax.random.normal(ks[3], (DIM,), jnp.float32),
        "bn0_beta":   0.1 * jax.random.normal(ks[4], (DIM,), jnp.float32),
        "bn0_mean":   0.1 * jax.random.normal(ks[5], (DIM,), jnp.float32),
        "bn0_var":    jnp.abs(1.0 + 0.1 * jax.random.normal(ks[6], (DIM,), jnp.float32)),
        "bn1_gamma":  1.0 + 0.1 * jax.random.normal(ks[7], (DIM,), jnp.float32),
        "bn1_beta":   0.1 * jax.random.normal(ks[8], (DIM,), jnp.float32),
        "bn1_mean":   0.1 * jax.random.normal(ks[9], (DIM,), jnp.float32),
        "bn1_var":    jnp.abs(1.0 + 0.1 * jax.random.normal(ks[10], (DIM,), jnp.float32)),
    }

    heads = jax.random.randint(ks[11], (B,), 0, N_ENT)
    rels = jax.random.randint(jax.random.fold_in(ks[11], 1), (B,), 0, 2 * N_REL)
    tails = jax.random.randint(jax.random.fold_in(ks[11], 2), (B,), 0, N_ENT)
    batch_inputs = jnp.stack([heads, rels, tails], axis=1).astype(jnp.int32)

    # TODO(synk): the `lookup is not None` branch (per-example candidate scoring
    # via bmm) and the unused `self.bias` parameter are not implemented; dropout
    # layers are eval-mode identity and BatchNorm uses running stats.
    out = tucker_forward(batch_inputs, params)
    out = jax.block_until_ready(out)

    ref = reference_forward(batch_inputs, params)
    assert out.shape == (B, N_ENT)
    assert jnp.allclose(out, ref, atol=1e-4, rtol=1e-4), float(jnp.max(jnp.abs(out - ref)))
    print("KERNEL_OK")
</pallas_src>

<mosaic_0001>
module attributes {stable_mosaic.version = 11 : i64} {
  func.func @_tucker_kernel(%arg0: i32, %arg1: i32, %arg2: memref<16x128xf32, #tpu.memory_space<vmem>>, %arg3: memref<16x32xf32, #tpu.memory_space<vmem>>, %arg4: memref<128x4096xf32, #tpu.memory_space<vmem>>, %arg5: memref<1x128xf32, #tpu.memory_space<vmem>>, %arg6: memref<1x128xf32, #tpu.memory_space<vmem>>, %arg7: memref<1x128xf32, #tpu.memory_space<vmem>>, %arg8: memref<1x128xf32, #tpu.memory_space<vmem>>, %arg9: memref<128x256xf32, #tpu.memory_space<vmem>>, %arg10: memref<16x256xf32, #tpu.memory_space<vmem>>, %arg11: memref<16x128xf32, #tpu.memory_space<vmem>>) attributes {dimension_semantics = [#tpu.dimension_semantics<parallel>, #tpu.dimension_semantics<arbitrary>], iteration_bounds = array<i64: 1, 1>, scalar_prefetch = 0 : i64, scratch_operands = 1 : i64, tpu.core_type = #tpu.core_type<tc>, window_params = [{transform_indices = @transform_0, window_bounds = array<i64: 16, 128>}, {transform_indices = @transform_1, window_bounds = array<i64: 16, 32>}, {pipeline_mode = #tpu.pipeline_mode<synchronous>, transform_indices = @transform_2, window_bounds = array<i64: 128, 4096>}, {pipeline_mode = #tpu.pipeline_mode<synchronous>, transform_indices = @transform_3, window_bounds = array<i64: 1, 128>}, {pipeline_mode = #tpu.pipeline_mode<synchronous>, transform_indices = @transform_4, window_bounds = array<i64: 1, 128>}, {pipeline_mode = #tpu.pipeline_mode<synchronous>, transform_indices = @transform_5, window_bounds = array<i64: 1, 128>}, {pipeline_mode = #tpu.pipeline_mode<synchronous>, transform_indices = @transform_6, window_bounds = array<i64: 1, 128>}, {transform_indices = @transform_7, window_bounds = array<i64: 128, 256>}, {transform_indices = @transform_8, window_bounds = array<i64: 16, 256>}]} {
    %c0_i32 = arith.constant 0 : i32
    %0 = arith.cmpi eq, %arg1, %c0_i32 : i32
    %1 = arith.extui %0 : i1 to i32
    %c0_i32_0 = arith.constant 0 : i32
    %2 = arith.cmpi ne, %1, %c0_i32_0 : i32
    scf.if %2 {
      %c0_9 = arith.constant 0 : index
      %c0_10 = arith.constant 0 : index
      %14 = vector.load %arg2[%c0_9, %c0_10] : memref<16x128xf32, #tpu.memory_space<vmem>>, vector<16x128xf32>
      %c0_11 = arith.constant 0 : index
      %c0_12 = arith.constant 0 : index
      %15 = vector.load %arg5[%c0_11, %c0_12] : memref<1x128xf32, #tpu.memory_space<vmem>>, vector<1x128xf32>
      %16 = vector.broadcast %15 : vector<1x128xf32> to vector<16x128xf32>
      %17 = arith.mulf %14, %16 : vector<16x128xf32>
      %c0_13 = arith.constant 0 : index
      %c0_14 = arith.constant 0 : index
      %18 = vector.load %arg6[%c0_13, %c0_14] : memref<1x128xf32, #tpu.memory_space<vmem>>, vector<1x128xf32>
      %19 = vector.broadcast %18 : vector<1x128xf32> to vector<16x128xf32>
      %20 = arith.addf %17, %19 : vector<16x128xf32>
      %c0_15 = arith.constant 0 : index
      %c0_16 = arith.constant 0 : index
      %21 = vector.load %arg4[%c0_15, %c0_16] : memref<128x4096xf32, #tpu.memory_space<vmem>>, vector<128x4096xf32>
      %cst_17 = arith.constant dense<0.000000e+00> : vector<16x4096xf32>
      %22 = tpu.matmul %20, %21, %cst_17 {dimension_numbers = #tpu.dot_dimension_numbers<[1], [0], [0], [1], [0, 0, 1, 1], [], []>} : vector<16x128xf32>, vector<128x4096xf32>, vector<16x4096xf32> -> vector<16x4096xf32>
      %c0_18 = arith.constant 0 : index
      %c0_19 = arith.constant 0 : index
      %23 = vector.load %arg3[%c0_18, %c0_19] : memref<16x32xf32, #tpu.memory_space<vmem>>, vector<16x32xf32>
      %24 = vector.extract_strided_slice %23 {offsets = [0, 0], sizes = [16, 1], strides = [1, 1]} : vector<16x32xf32> to vector<16x1xf32>
      %25 = vector.extract_strided_slice %22 {offsets = [0, 0], sizes = [16, 128], strides = [1, 1]} : vector<16x4096xf32> to vector<16x128xf32>
      %26 = vector.broadcast %24 : vector<16x1xf32> to vector<16x128xf32>
      %27 = arith.mulf %26, %25 : vector<16x128xf32>
      %28 = vector.extract_strided_slice %23 {offsets = [0, 1], sizes = [16, 1], strides = [1, 1]} : vector<16x32xf32> to vector<16x1xf32>
      %29 = vector.extract_strided_slice %22 {offsets = [0, 128], sizes = [16, 128], strides = [1, 1]} : vector<16x4096xf32> to vector<16x128xf32>
      %30 = vector.broadcast %28 : vector<16x1xf32> to vector<16x128xf32>
      %31 = arith.mulf %30, %29 : vector<16x128xf32>
      %32 = arith.addf %27, %31 : vector<16x128xf32>
      %33 = vector.extract_strided_slice %23 {offsets = [0, 2], sizes = [16, 1], strides = [1, 1]} : vector<16x32xf32> to vector<16x1xf32>
      %34 = vector.extract_strided_slice %22 {offsets = [0, 256], sizes = [16, 128], strides = [1, 1]} : vector<16x4096xf32> to vector<16x128xf32>
      %35 = vector.broadcast %33 : vector<16x1xf32> to vector<16x128xf32>
      %36 = arith.mulf %35, %34 : vector<16x128xf32>
      %37 = arith.addf %32, %36 : vector<16x128xf32>
      %38 = vector.extract_strided_slice %23 {offsets = [0, 3], sizes = [16, 1], strides = [1, 1]} : vector<16x32xf32> to vector<16x1xf32>
      %39 = vector.extract_strided_slice %22 {offsets = [0, 384], sizes = [16, 128], strides = [1, 1]} : vector<16x4096xf32> to vector<16x128xf32>
      %40 = vector.broadcast %38 : vector<16x1xf32> to vector<16x128xf32>
      %41 = arith.mulf %40, %39 : vector<16x128xf32>
      %42 = arith.addf %37, %41 : vector<16x128xf32>
      %43 = vector.extract_strided_slice %23 {offsets = [0, 4], sizes = [16, 1], strides = [1, 1]} : vector<16x32xf32> to vector<16x1xf32>
      %44 = vector.extract_strided_slice %22 {offsets = [0, 512], sizes = [16, 128], strides = [1, 1]} : vector<16x4096xf32> to vector<16x128xf32>
      %45 = vector.broadcast %43 : vector<16x1xf32> to vector<16x128xf32>
      %46 = arith.mulf %45, %44 : vector<16x128xf32>
      %47 = arith.addf %42, %46 : vector<16x128xf32>
      %48 = vector.extract_strided_slice %23 {offsets = [0, 5], sizes = [16, 1], strides = [1, 1]} : vector<16x32xf32> to vector<16x1xf32>
      %49 = vector.extract_strided_slice %22 {offsets = [0, 640], sizes = [16, 128], strides = [1, 1]} : vector<16x4096xf32> to vector<16x128xf32>
      %50 = vector.broadcast %48 : vector<16x1xf32> to vector<16x128xf32>
      %51 = arith.mulf %50, %49 : vector<16x128xf32>
      %52 = arith.addf %47, %51 : vector<16x128xf32>
      %53 = vector.extract_strided_slice %23 {offsets = [0, 6], sizes = [16, 1], strides = [1, 1]} : vector<16x32xf32> to vector<16x1xf32>
      %54 = vector.extract_strided_slice %22 {offsets = [0, 768], sizes = [16, 128], strides = [1, 1]} : vector<16x4096xf32> to vector<16x128xf32>
      %55 = vector.broadcast %53 : vector<16x1xf32> to vector<16x128xf32>
      %56 = arith.mulf %55, %54 : vector<16x128xf32>
      %57 = arith.addf %52, %56 : vector<16x128xf32>
      %58 = vector.extract_strided_slice %23 {offsets = [0, 7], sizes = [16, 1], strides = [1, 1]} : vector<16x32xf32> to vector<16x1xf32>
      %59 = vector.extract_strided_slice %22 {offsets = [0, 896], sizes = [16, 128], strides = [1, 1]} : vector<16x4096xf32> to vector<16x128xf32>
      %60 = vector.broadcast %58 : vector<16x1xf32> to vector<16x128xf32>
      %61 = arith.mulf %60, %59 : vector<16x128xf32>
      %62 = arith.addf %57, %61 : vector<16x128xf32>
      %63 = vector.extract_strided_slice %23 {offsets = [0, 8], sizes = [16, 1], strides = [1, 1]} : vector<16x32xf32> to vector<16x1xf32>
      %64 = vector.extract_strided_slice %22 {offsets = [0, 1024], sizes = [16, 128], strides = [1, 1]} : vector<16x4096xf32> to vector<16x128xf32>
      %65 = vector.broadcast %63 : vector<16x1xf32> to vector<16x128xf32>
      %66 = arith.mulf %65, %64 : vector<16x128xf32>
      %67 = arith.addf %62, %66 : vector<16x128xf32>
      %68 = vector.extract_strided_slice %23 {offsets = [0, 9], sizes = [16, 1], strides = [1, 1]} : vector<16x32xf32> to vector<16x1xf32>
      %69 = vector.extract_strided_slice %22 {offsets = [0, 1152], sizes = [16, 128], strides = [1, 1]} : vector<16x4096xf32> to vector<16x128xf32>
      %70 = vector.broadcast %68 : vector<16x1xf32> to vector<16x128xf32>
      %71 = arith.mulf %70, %69 : vector<16x128xf32>
      %72 = arith.addf %67, %71 : vector<16x128xf32>
      %73 = vector.extract_strided_slice %23 {offsets = [0, 10], sizes = [16, 1], strides = [1, 1]} : vector<16x32xf32> to vector<16x1xf32>
      %74 = vector.extract_strided_slice %22 {offsets = [0, 1280], sizes = [16, 128], strides = [1, 1]} : vector<16x4096xf32> to vector<16x128xf32>
      %75 = vector.broadcast %73 : vector<16x1xf32> to vector<16x128xf32>
      %76 = arith.mulf %75, %74 : vector<16x128xf32>
      %77 = arith.addf %72, %76 : vector<16x128xf32>
      %78 = vector.extract_strided_slice %23 {offsets = [0, 11], sizes = [16, 1], strides = [1, 1]} : vector<16x32xf32> to vector<16x1xf32>
      %79 = vector.extract_strided_slice %22 {offsets = [0, 1408], sizes = [16, 128], strides = [1, 1]} : vector<16x4096xf32> to vector<16x128xf32>
      %80 = vector.broadcast %78 : vector<16x1xf32> to vector<16x128xf32>
      %81 = arith.mulf %80, %79 : vector<16x128xf32>
      %82 = arith.addf %77, %81 : vector<16x128xf32>
      %83 = vector.extract_strided_slice %23 {offsets = [0, 12], sizes = [16, 1], strides = [1, 1]} : vector<16x32xf32> to vector<16x1xf32>
      %84 = vector.extract_strided_slice %22 {offsets = [0, 1536], sizes = [16, 128], strides = [1, 1]} : vector<16x4096xf32> to vector<16x128xf32>
      %85 = vector.broadcast %83 : vector<16x1xf32> to vector<16x128xf32>
      %86 = arith.mulf %85, %84 : vector<16x128xf32>
      %87 = arith.addf %82, %86 : vector<16x128xf32>
      %88 = vector.extract_strided_slice %23 {offsets = [0, 13], sizes = [16, 1], strides = [1, 1]} : vector<16x32xf32> to vector<16x1xf32>
      %89 = vector.extract_strided_slice %22 {offsets = [0, 1664], sizes = [16, 128], strides = [1, 1]} : vector<16x4096xf32> to vector<16x128xf32>
      %90 = vector.broadcast %88 : vector<16x1xf32> to vector<16x128xf32>
      %91 = arith.mulf %90, %89 : vector<16x128xf32>
      %92 = arith.addf %87, %91 : vector<16x128xf32>
      %93 = vector.extract_strided_slice %23 {offsets = [0, 14], sizes = [16, 1], strides = [1, 1]} : vector<16x32xf32> to vector<16x1xf32>
      %94 = vector.extract_strided_slice %22 {offsets = [0, 1792], sizes = [16, 128], strides = [1, 1]} : vector<16x4096xf32> to vector<16x128xf32>
      %95 = vector.broadcast %93 : vector<16x1xf32> to vector<16x128xf32>
      %96 = arith.mulf %95, %94 : vector<16x128xf32>
      %97 = arith.addf %92, %96 : vector<16x128xf32>
      %98 = vector.extract_strided_slice %23 {offsets = [0, 15], sizes = [16, 1], strides = [1, 1]} : vector<16x32xf32> to vector<16x1xf32>
      %99 = vector.extract_strided_slice %22 {offsets = [0, 1920], sizes = [16, 128], strides = [1, 1]} : vector<16x4096xf32> to vector<16x128xf32>
      %100 = vector.broadcast %98 : vector<16x1xf32> to vector<16x128xf32>
      %101 = arith.mulf %100, %99 : vector<16x128xf32>
      %102 = arith.addf %97, %101 : vector<16x128xf32>
      %103 = vector.extract_strided_slice %23 {offsets = [0, 16], sizes = [16, 1], strides = [1, 1]} : vector<16x32xf32> to vector<16x1xf32>
      %104 = vector.extract_strided_slice %22 {offsets = [0, 2048], sizes = [16, 128], strides = [1, 1]} : vector<16x4096xf32> to vector<16x128xf32>
      %105 = vector.broadcast %103 : vector<16x1xf32> to vector<16x128xf32>
      %106 = arith.mulf %105, %104 : vector<16x128xf32>
      %107 = arith.addf %102, %106 : vector<16x128xf32>
      %108 = vector.extract_strided_slice %23 {offsets = [0, 17], sizes = [16, 1], strides = [1, 1]} : vector<16x32xf32> to vector<16x1xf32>
      %109 = vector.extract_strided_slice %22 {offsets = [0, 2176], sizes = [16, 128], strides = [1, 1]} : vector<16x4096xf32> to vector<16x128xf32>
      %110 = vector.broadcast %108 : vector<16x1xf32> to vector<16x128xf32>
      %111 = arith.mulf %110, %109 : vector<16x128xf32>
      %112 = arith.addf %107, %111 : vector<16x128xf32>
      %113 = vector.extract_strided_slice %23 {offsets = [0, 18], sizes = [16, 1], strides = [1, 1]} : vector<16x32xf32> to vector<16x1xf32>
      %114 = vector.extract_strided_slice %22 {offsets = [0, 2304], sizes = [16, 128], strides = [1, 1]} : vector<16x4096xf32> to vector<16x128xf32>
      %115 = vector.broadcast %113 : vector<16x1xf32> to vector<16x128xf32>
      %116 = arith.mulf %115, %114 : vector<16x128xf32>
      %117 = arith.addf %112, %116 : vector<16x128xf32>
      %118 = vector.extract_strided_slice %23 {offsets = [0, 19], sizes = [16, 1], strides = [1, 1]} : vector<16x32xf32> to vector<16x1xf32>
      %119 = vector.extract_strided_slice %22 {offsets = [0, 2432], sizes = [16, 128], strides = [1, 1]} : vector<16x4096xf32> to vector<16x128xf32>
      %120 = vector.broadcast %118 : vector<16x1xf32> to vector<16x128xf32>
      %121 = arith.mulf %120, %119 : vector<16x128xf32>
      %122 = arith.addf %117, %121 : vector<16x128xf32>
      %123 = vector.extract_strided_slice %23 {offsets = [0, 20], sizes = [16, 1], strides = [1, 1]} : vector<16x32xf32> to vector<16x1xf32>
      %124 = vector.extract_strided_slice %22 {offsets = [0, 2560], sizes = [16, 128], strides = [1, 1]} : vector<16x4096xf32> to vector<16x128xf32>
      %125 = vector.broadcast %123 : vector<16x1xf32> to vector<16x128xf32>
      %126 = arith.mulf %125, %124 : vector<16x128xf32>
      %127 = arith.addf %122, %126 : vector<16x128xf32>
      %128 = vector.extract_strided_slice %23 {offsets = [0, 21], sizes = [16, 1], strides = [1, 1]} : vector<16x32xf32> to vector<16x1xf32>
      %129 = vector.extract_strided_slice %22 {offsets = [0, 2688], sizes = [16, 128], strides = [1, 1]} : vector<16x4096xf32> to vector<16x128xf32>
      %130 = vector.broadcast %128 : vector<16x1xf32> to vector<16x128xf32>
      %131 = arith.mulf %130, %129 : vector<16x128xf32>
      %132 = arith.addf %127, %131 : vector<16x128xf32>
      %133 = vector.extract_strided_slice %23 {offsets = [0, 22], sizes = [16, 1], strides = [1, 1]} : vector<16x32xf32> to vector<16x1xf32>
      %134 = vector.extract_strided_slice %22 {offsets = [0, 2816], sizes = [16, 128], strides = [1, 1]} : vector<16x4096xf32> to vector<16x128xf32>
      %135 = vector.broadcast %133 : vector<16x1xf32> to vector<16x128xf32>
      %136 = arith.mulf %135, %134 : vector<16x128xf32>
      %137 = arith.addf %132, %136 : vector<16x128xf32>
      %138 = vector.extract_strided_slice %23 {offsets = [0, 23], sizes = [16, 1], strides = [1, 1]} : vector<16x32xf32> to vector<16x1xf32>
      %139 = vector.extract_strided_slice %22 {offsets = [0, 2944], sizes = [16, 128], strides = [1, 1]} : vector<16x4096xf32> to vector<16x128xf32>
      %140 = vector.broadcast %138 : vector<16x1xf32> to vector<16x128xf32>
      %141 = arith.mulf %140, %139 : vector<16x128xf32>
      %142 = arith.addf %137, %141 : vector<16x128xf32>
      %143 = vector.extract_strided_slice %23 {offsets = [0, 24], sizes = [16, 1], strides = [1, 1]} : vector<16x32xf32> to vector<16x1xf32>
      %144 = vector.extract_strided_slice %22 {offsets = [0, 3072], sizes = [16, 128], strides = [1, 1]} : vector<16x4096xf32> to vector<16x128xf32>
      %145 = vector.broadcast %143 : vector<16x1xf32> to vector<16x128xf32>
      %146 = arith.mulf %145, %144 : vector<16x128xf32>
      %147 = arith.addf %142, %146 : vector<16x128xf32>
      %148 = vector.extract_strided_slice %23 {offsets = [0, 25], sizes = [16, 1], strides = [1, 1]} : vector<16x32xf32> to vector<16x1xf32>
      %149 = vector.extract_strided_slice %22 {offsets = [0, 3200], sizes = [16, 128], strides = [1, 1]} : vector<16x4096xf32> to vector<16x128xf32>
      %150 = vector.broadcast %148 : vector<16x1xf32> to vector<16x128xf32>
      %151 = arith.mulf %150, %149 : vector<16x128xf32>
      %152 = arith.addf %147, %151 : vector<16x128xf32>
      %153 = vector.extract_strided_slice %23 {offsets = [0, 26], sizes = [16, 1], strides = [1, 1]} : vector<16x32xf32> to vector<16x1xf32>
      %154 = vector.extract_strided_slice %22 {offsets = [0, 3328], sizes = [16, 128], strides = [1, 1]} : vector<16x4096xf32> to vector<16x128xf32>
      %155 = vector.broadcast %153 : vector<16x1xf32> to vector<16x128xf32>
      %156 = arith.mulf %155, %154 : vector<16x128xf32>
      %157 = arith.addf %152, %156 : vector<16x128xf32>
      %158 = vector.extract_strided_slice %23 {offsets = [0, 27], sizes = [16, 1], strides = [1, 1]} : vector<16x32xf32> to vector<16x1xf32>
      %159 = vector.extract_strided_slice %22 {offsets = [0, 3456], sizes = [16, 128], strides = [1, 1]} : vector<16x4096xf32> to vector<16x128xf32>
      %160 = vector.broadcast %158 : vector<16x1xf32> to vector<16x128xf32>
      %161 = arith.mulf %160, %159 : vector<16x128xf32>
      %162 = arith.addf %157, %161 : vector<16x128xf32>
      %163 = vector.extract_strided_slice %23 {offsets = [0, 28], sizes = [16, 1], strides = [1, 1]} : vector<16x32xf32> to vector<16x1xf32>
      %164 = vector.extract_strided_slice %22 {offsets = [0, 3584], sizes = [16, 128], strides = [1, 1]} : vector<16x4096xf32> to vector<16x128xf32>
      %165 = vector.broadcast %163 : vector<16x1xf32> to vector<16x128xf32>
      %166 = arith.mulf %165, %164 : vector<16x128xf32>
      %167 = arith.addf %162, %166 : vector<16x128xf32>
      %168 = vector.extract_strided_slice %23 {offsets = [0, 29], sizes = [16, 1], strides = [1, 1]} : vector<16x32xf32> to vector<16x1xf32>
      %169 = vector.extract_strided_slice %22 {offsets = [0, 3712], sizes = [16, 128], strides = [1, 1]} : vector<16x4096xf32> to vector<16x128xf32>
      %170 = vector.broadcast %168 : vector<16x1xf32> to vector<16x128xf32>
      %171 = arith.mulf %170, %169 : vector<16x128xf32>
      %172 = arith.addf %167, %171 : vector<16x128xf32>
      %173 = vector.extract_strided_slice %23 {offsets = [0, 30], sizes = [16, 1], strides = [1, 1]} : vector<16x32xf32> to vector<16x1xf32>
      %174 = vector.extract_strided_slice %22 {offsets = [0, 3840], sizes = [16, 128], strides = [1, 1]} : vector<16x4096xf32> to vector<16x128xf32>
      %175 = vector.broadcast %173 : vector<16x1xf32> to vector<16x128xf32>
      %176 = arith.mulf %175, %174 : vector<16x128xf32>
      %177 = arith.addf %172, %176 : vector<16x128xf32>
      %178 = vector.extract_strided_slice %23 {offsets = [0, 31], sizes = [16, 1], strides = [1, 1]} : vector<16x32xf32> to vector<16x1xf32>
      %179 = vector.extract_strided_slice %22 {offsets = [0, 3968], sizes = [16, 128], strides = [1, 1]} : vector<16x4096xf32> to vector<16x128xf32>
      %180 = vector.broadcast %178 : vector<16x1xf32> to vector<16x128xf32>
      %181 = arith.mulf %180, %179 : vector<16x128xf32>
      %182 = arith.addf %177, %181 : vector<16x128xf32>
      %c0_20 = arith.constant 0 : index
      %c0_21 = arith.constant 0 : index
      %183 = vector.load %arg7[%c0_20, %c0_21] : memref<1x128xf32, #tpu.memory_space<vmem>>, vector<1x128xf32>
      %184 = vector.broadcast %183 : vector<1x128xf32> to vector<16x128xf32>
      %185 = arith.mulf %182, %184 : vector<16x128xf32>
      %c0_22 = arith.constant 0 : index
      %c0_23 = arith.constant 0 : index
      %186 = vector.load %arg8[%c0_22, %c0_23] : memref<1x128xf32, #tpu.memory_space<vmem>>, vector<1x128xf32>
      %187 = vector.broadcast %186 : vector<1x128xf32> to vector<16x128xf32>
      %188 = arith.addf %185, %187 : vector<16x128xf32>
      %c0_24 = arith.constant 0 : index
      %c0_25 = arith.constant 0 : index
      %189 = vector.load %arg11[%c0_24, %c0_25] : memref<16x128xf32, #tpu.memory_space<vmem>>, vector<16x128xf32>
      tpu.vector_store %arg11[%c0_24, %c0_25], %188 {strides = array<i32>} : memref<16x128xf32, #tpu.memory_space<vmem>>, vector<16x128xf32>,
    } else {
    }
    %c0 = arith.constant 0 : index
    %c0_1 = arith.constant 0 : index
    %3 = vector.load %arg11[%c0, %c0_1] : memref<16x128xf32, #tpu.memory_space<vmem>>, vector<16x128xf32>
    %c0_2 = arith.constant 0 : index
    %c0_3 = arith.constant 0 : index
    %4 = vector.load %arg9[%c0_2, %c0_3] : memref<128x256xf32, #tpu.memory_space<vmem>>, vector<128x256xf32>
    %cst = arith.constant dense<0.000000e+00> : vector<16x256xf32>
    %5 = tpu.matmul %3, %4, %cst {dimension_numbers = #tpu.dot_dimension_numbers<[1], [0], [0], [1], [0, 0, 1, 1], [], []>} : vector<16x128xf32>, vector<128x256xf32>, vector<16x256xf32> -> vector<16x256xf32>
    %cst_4 = arith.constant 0.000000e+00 : f32
    %6 = vector.broadcast %cst_4 : f32 to vector<16x256xf32>
    %7 = arith.subf %6, %5 : vector<16x256xf32>
    %8 = math.exp %7 : vector<16x256xf32>
    %cst_5 = arith.constant 1.000000e+00 : f32
    %9 = vector.broadcast %cst_5 : f32 to vector<16x256xf32>
    %10 = arith.addf %9, %8 : vector<16x256xf32>
    %cst_6 = arith.constant 1.000000e+00 : f32
    %11 = vector.broadcast %cst_6 : f32 to vector<16x256xf32>
    %12 = arith.divf %11, %10 : vector<16x256xf32>
    %c0_7 = arith.constant 0 : index
    %c0_8 = arith.constant 0 : index
    %13 = vector.load %arg10[%c0_7, %c0_8] : memref<16x256xf32, #tpu.memory_space<vmem>>, vector<16x256xf32>
    tpu.vector_store %arg10[%c0_7, %c0_8], %12 {strides = array<i32>} : memref<16x256xf32, #tpu.memory_space<vmem>>, vector<16x256xf32>,
    return
  }
  func.func @transform_0(%arg0: i32, %arg1: i32) -> (i32, i32) {
    %c0_i32 = arith.constant 0 : i32
    %c0_i32_0 = arith.constant 0 : i32
    return %arg0, %c0_i32 : i32, i32
  }
  func.func @transform_1(%arg0: i32, %arg1: i32) -> (i32, i32) {
    %c0_i32 = arith.constant 0 : i32
    %c0_i32_0 = arith.constant 0 : i32
    return %arg0, %c0_i32 : i32, i32
  }
  func.func @transform_2(%arg0: i32, %arg1: i32) -> (i32, i32) {
    %c0_i32 = arith.constant 0 : i32
    %c0_i32_0 = arith.constant 0 : i32
    %c0_i32_1 = arith.constant 0 : i32
    return %c0_i32, %c0_i32_0 : i32, i32
  }
  func.func @transform_3(%arg0: i32, %arg1: i32) -> (i32, i32) {
    %c0_i32 = arith.constant 0 : i32
    %c0_i32_0 = arith.constant 0 : i32
    %c0_i32_1 = arith.constant 0 : i32
    return %c0_i32, %c0_i32_0 : i32, i32
  }
  func.func @transform_4(%arg0: i32, %arg1: i32) -> (i32, i32) {
    %c0_i32 = arith.constant 0 : i32
    %c0_i32_0 = arith.constant 0 : i32
    %c0_i32_1 = arith.constant 0 : i32
    return %c0_i32, %c0_i32_0 : i32, i32
  }
  func.func @transform_5(%arg0: i32, %arg1: i32) -> (i32, i32) {
    %c0_i32 = arith.constant 0 : i32
    %c0_i32_0 = arith.constant 0 : i32
    %c0_i32_1 = arith.constant 0 : i32
    return %c0_i32, %c0_i32_0 : i32, i32
  }
  func.func @transform_6(%arg0: i32, %arg1: i32) -> (i32, i32) {
    %c0_i32 = arith.constant 0 : i32
    %c0_i32_0 = arith.constant 0 : i32
    %c0_i32_1 = arith.constant 0 : i32
    return %c0_i32, %c0_i32_0 : i32, i32
  }
  func.func @transform_7(%arg0: i32, %arg1: i32) -> (i32, i32) {
    %c0_i32 = arith.constant 0 : i32
    %c0_i32_0 = arith.constant 0 : i32
    return %c0_i32, %arg1 : i32, i32
  }
  func.func @transform_8(%arg0: i32, %arg1: i32) -> (i32, i32) {
    %c0_i32 = arith.constant 0 : i32
    return %arg0, %arg1 : i32, i32
  }
}

</mosaic_0001>

<llo_original>
// kernel: tpu_custom_call.1
$region0: #{tpu_custom_call.1}
  #allocation0 [shape = 'u32[]', space=smem, size = 0x4, offset = 0x4, fixed_abs, tag = 'smem constant byte address 0x4 - core index']
  #allocation1 [shape = 'u32[144,128]{1,0:T(1,128)}', space=vmem, size = 0x12000, scoped, tag = 'internal scratch']
  #allocation2 [shape = 'f32[16,128]{1,0:T(8,128)}', space=vmem, size = 0x2000, scoped, tag = 'scratch operand']
  %s0 = inlined_call_operand.hbm [shape: f32[16,128], index: 0, kind: input, shape index: {}]
  %s1 = inlined_call_operand.hbm [shape: f32[16,32], index: 1, kind: input, shape index: {}]
  %s2 = inlined_call_operand.hbm [shape: f32[128,4096], index: 2, kind: input, shape index: {}]
  %s3 = inlined_call_operand.hbm [shape: f32[1,128], index: 3, kind: input, shape index: {}]
  %s4 = inlined_call_operand.hbm [shape: f32[1,128], index: 4, kind: input, shape index: {}]
  %s5 = inlined_call_operand.hbm [shape: f32[1,128], index: 5, kind: input, shape index: {}]
  %s6 = inlined_call_operand.hbm [shape: f32[1,128], index: 6, kind: input, shape index: {}]
  %s7 = inlined_call_operand.hbm [shape: f32[128,256], index: 7, kind: input, shape index: {}]
  %s8 = inlined_call_operand.hbm [shape: f32[16,256], index: 8, kind: output, shape index: {}]
  %s9 = sld [smem:[#allocation0]]
  $region78: #{tpu_custom_call.1} parent=0
    _
  %s11 = ssub.s32 1, %s9
  %s12 = scalar_select 0, %s11, %s9
  $region1: #{tpu_custom_call.1} parent=0
    #allocation3 [shape = 'u8[8192]{0}', space=vmem, size = 0x2000, scoped, tag = 'input window, operand 0, single buffered']
    #allocation4 [shape = 's32[1]{0}', space=sflag, size = 0x4, scoped, tag = 'scoped memory for tpu_custom_call.1']
    #allocation5 [shape = 's32[1]{0}', space=sflag, size = 0x4, scoped, tag = 'scoped memory for tpu_custom_call.1']
    #allocation6 [shape = 'u8[8192]{0}', space=vmem, size = 0x2000, scoped, tag = 'input window, operand 1, single buffered']
    #allocation7 [shape = 's32[1]{0}', space=sflag, size = 0x4, scoped, tag = 'scoped memory for tpu_custom_call.1']
    #allocation8 [shape = 'u8[2097152]{0}', space=vmem, size = 0x200000, scoped, tag = 'input window, operand 2, single buffered']
    #allocation9 [shape = 'u8[512]{0}', space=vmem, size = 0x400, scoped, tag = 'input window, operand 3, single buffered']
    #allocation10 [shape = 's32[1]{0}', space=sflag, size = 0x4, scoped, tag = 'scoped memory for tpu_custom_call.1']
    #allocation11 [shape = 'u8[512]{0}', space=vmem, size = 0x400, scoped, tag = 'input window, operand 4, single buffered']
    #allocation12 [shape = 'u8[512]{0}', space=vmem, size = 0x400, scoped, tag = 'input window, operand 5, single buffered']
    #allocation13 [shape = 's32[1]{0}', space=sflag, size = 0x4, scoped, tag = 'scoped memory for tpu_custom_call.1']
    #allocation14 [shape = 'u8[512]{0}', space=vmem, size = 0x400, scoped, tag = 'input window, operand 6, single buffered']
    #allocation15 [shape = 'u8[131072]{0}', space=vmem, size = 0x20000, scoped, tag = 'input window, operand 7, single buffered']
    #allocation16 [shape = 's32[1]{0}', space=sflag, size = 0x4, scoped, tag = 'scoped memory for tpu_custom_call.1']
    #allocation17 [shape = 'u8[16384]{0}', space=vmem, size = 0x4000, scoped, tag = 'output window, operand 0, single buffered']
    %13 = vsyncpa [#allocation4], 0
    %14 = vsyncpa [#allocation7], 0
    %15 = vsyncpa [#allocation10], 0
    %16 = vsyncpa [#allocation13], 0
    %17 = vsyncpa [#allocation16], 0
    %18 = vsyncpa [#allocation5], 0
    // Predicated region
    $region2: #{tpu_custom_call.1} parent=1 // pred_check
      _
    $region3: #{tpu_custom_call.1} parent=1 // pred_check_branch
      %20 = sbr.rel (0) target = $region5
    $region4: #{tpu_custom_call.1} parent=1 // pred_region
      %s22 = ssub.s32 256, 256
      %23 = vsyncadd [#allocation4], %s22
      %s24 = sshll.u32 [#allocation3], 4
      %s25 = int_to_ptr.vmem [resolvable:$true] %s24
      %30 = dma.hbm_to_vmem [thread:$0]  %s0, 256, %s25, [#allocation4], 128, 128, 8
    $region5: #{tpu_custom_call.1} parent=1 // pred_fallthru
      _
    // Predicated region
    $region6: #{tpu_custom_call.1} parent=1 // pred_check
      _
    $region7: #{tpu_custom_call.1} parent=1 // pred_check_branch
      %32 = sbr.rel (0) target = $region9
    $region8: #{tpu_custom_call.1} parent=1 // pred_region
      %s34 = ssub.s32 256, 256
      %35 = vsyncadd [#allocation7], %s34
      %s36 = sshll.u32 [#allocation6], 4
      %s37 = int_to_ptr.vmem [resolvable:$true] %s36
      %42 = dma.hbm_to_vmem [thread:$0]  %s1, 256, %s37, [#allocation7], 128, 128, 8
    $region9: #{tpu_custom_call.1} parent=1 // pred_fallthru
      _
    // Predicated region
    $region10: #{tpu_custom_call.1} parent=1 // pred_check
      _
    $region11: #{tpu_custom_call.1} parent=1 // pred_check_branch
      %44 = sbr.rel (0) target = $region13
    $region12: #{tpu_custom_call.1} parent=1 // pred_region
      %s46 = ssub.s32 65536, 65536
      %47 = vsyncadd [#allocation7], %s46
      %s48 = sshll.u32 [#allocation8], 4
      %s49 = int_to_ptr.vmem [resolvable:$true] %s48
      %54 = dma.hbm_to_vmem [thread:$0]  %s2, 65536, %s49, [#allocation7], 4096, 4096, 256
    $region13: #{tpu_custom_call.1} parent=1 // pred_fallthru
      _
    // Predicated region
    $region14: #{tpu_custom_call.1} parent=1 // pred_check
      _
    $region15: #{tpu_custom_call.1} parent=1 // pred_check_branch
      %56 = sbr.rel (0) target = $region17
    $region16: #{tpu_custom_call.1} parent=1 // pred_region
      %s58 = ssub.s32 16, 16
      %59 = vsyncadd [#allocation10], %s58
      %s61 = sshll.u32 [#allocation9], 4
      %s62 = int_to_ptr.vmem [resolvable:$true] %s61
      %64 = dma.hbm_to_vmem [thread:$0]  %s3, 16, %s62, [#allocation10]
    $region17: #{tpu_custom_call.1} parent=1 // pred_fallthru
      _
    // Predicated region
    $region18: #{tpu_custom_call.1} parent=1 // pred_check
      _
    $region19: #{tpu_custom_call.1} parent=1 // pred_check_branch
      %66 = sbr.rel (0) target = $region21
    $region20: #{tpu_custom_call.1} parent=1 // pred_region
      %s68 = ssub.s32 16, 16
      %69 = vsyncadd [#allocation10], %s68
      %s71 = sshll.u32 [#allocation11], 4
      %s72 = int_to_ptr.vmem [resolvable:$true] %s71
      %74 = dma.hbm_to_vmem [thread:$0]  %s4, 16, %s72, [#allocation10]
    $region21: #{tpu_custom_call.1} parent=1 // pred_fallthru
      _
    // Predicated region
    $region22: #{tpu_custom_call.1} parent=1 // pred_check
      _
    $region23: #{tpu_custom_call.1} parent=1 // pred_check_branch
      %76 = sbr.rel (0) target = $region25
    $region24: #{tpu_custom_call.1} parent=1 // pred_region
      %s78 = ssub.s32 16, 16
      %79 = vsyncadd [#allocation13], %s78
      %s81 = sshll.u32 [#allocation12], 4
      %s82 = int_to_ptr.vmem [resolvable:$true] %s81
      %84 = dma.hbm_to_vmem [thread:$0]  %s5, 16, %s82, [#allocation13]
    $region25: #{tpu_custom_call.1} parent=1 // pred_fallthru
      _
    // Predicated region
    $region26: #{tpu_custom_call.1} parent=1 // pred_check
      _
    $region27: #{tpu_custom_call.1} parent=1 // pred_check_branch
      %86 = sbr.rel (0) target = $region29
    $region28: #{tpu_custom_call.1} parent=1 // pred_region
      %s88 = ssub.s32 16, 16
      %89 = vsyncadd [#allocation13], %s88
      %s91 = sshll.u32 [#allocation14], 4
      %s92 = int_to_ptr.vmem [resolvable:$true] %s91
      %94 = dma.hbm_to_vmem [thread:$0]  %s6, 16, %s92, [#allocation13]
    $region29: #{tpu_custom_call.1} parent=1 // pred_fallthru
      _
    // Predicated region
    $region30: #{tpu_custom_call.1} parent=1 // pred_check
      _
    $region31: #{tpu_custom_call.1} parent=1 // pred_check_branch
      %96 = sbr.rel (0) target = $region33
    $region32: #{tpu_custom_call.1} parent=1 // pred_region
      %s98 = ssub.s32 4096, 4096
      %99 = vsyncadd [#allocation16], %s98
      %s100 = sshll.u32 [#allocation15], 4
      %s101 = int_to_ptr.vmem [resolvable:$true] %s100
      %106 = dma.hbm_to_vmem [thread:$0]  %s7, 4096, %s101, [#allocation16], 256, 256, 16
    $region33: #{tpu_custom_call.1} parent=1 // pred_fallthru
      _
    // Predicated region
    $region34: #{tpu_custom_call.1} parent=1 // pred_check
      _
    $region35: #{tpu_custom_call.1} parent=1 // pred_check_branch
      %108 = sbr.rel (0) target = $region37
    $region36: #{tpu_custom_call.1} parent=1 // pred_region
      %109 = dma.done [#allocation4], 256
    $region37: #{tpu_custom_call.1} parent=1 // pred_fallthru
      _
    // Predicated region
    $region38: #{tpu_custom_call.1} parent=1 // pred_check
      _
    $region39: #{tpu_custom_call.1} parent=1 // pred_check_branch
      %111 = sbr.rel (0) target = $region41
    $region40: #{tpu_custom_call.1} parent=1 // pred_region
      %112 = dma.done [#allocation7], 256
    $region41: #{tpu_custom_call.1} parent=1 // pred_fallthru
      _
    // Predicated region
    $region42: #{tpu_custom_call.1} parent=1 // pred_check
      _
    $region43: #{tpu_custom_call.1} parent=1 // pred_check_branch
      %114 = sbr.rel (0) target = $region45
    $region44: #{tpu_custom_call.1} parent=1 // pred_region
      %115 = dma.done [#allocation7], 65536
    $region45: #{tpu_custom_call.1} parent=1 // pred_fallthru
      _
    // Predicated region
    $region46: #{tpu_custom_call.1} parent=1 // pred_check
      _
    $region47: #{tpu_custom_call.1} parent=1 // pred_check_branch
      %117 = sbr.rel (0) target = $region49
    $region48: #{tpu_custom_call.1} parent=1 // pred_region
      %118 = dma.done [#allocation10], 16
    $region49: #{tpu_custom_call.1} parent=1 // pred_fallthru
      _
    // Predicated region
    $region50: #{tpu_custom_call.1} parent=1 // pred_check
      _
    $region51: #{tpu_custom_call.1} parent=1 // pred_check_branch
      %120 = sbr.rel (0) target = $region53
    $region52: #{tpu_custom_call.1} parent=1 // pred_region
      %121 = dma.done [#allocation10], 16
    $region53: #{tpu_custom_call.1} parent=1 // pred_fallthru
      _
    // Predicated region
    $region54: #{tpu_custom_call.1} parent=1 // pred_check
      _
    $region55: #{tpu_custom_call.1} parent=1 // pred_check_branch
      %123 = sbr.rel (0) target = $region57
    $region56: #{tpu_custom_call.1} parent=1 // pred_region
      %124 = dma.done [#allocation13], 16
    $region57: #{tpu_custom_call.1} parent=1 // pred_fallthru
      _
    // Predicated region
    $region58: #{tpu_custom_call.1} parent=1 // pred_check
      _
    $region59: #{tpu_custom_call.1} parent=1 // pred_check_branch
      %126 = sbr.rel (0) target = $region61
    $region60: #{tpu_custom_call.1} parent=1 // pred_region
      %127 = dma.done [#allocation13], 16
    $region61: #{tpu_custom_call.1} parent=1 // pred_fallthru
      _
    // Predicated region
    $region62: #{tpu_custom_call.1} parent=1 // pred_check
      _
    $region63: #{tpu_custom_call.1} parent=1 // pred_check_branch
      %129 = sbr.rel (0) target = $region65
    $region64: #{tpu_custom_call.1} parent=1 // pred_region
      %130 = dma.done [#allocation16], 4096
    $region65: #{tpu_custom_call.1} parent=1 // pred_fallthru
      _
    %p131 = scmp.eq.s32.totalorder 0, 0
    // Predicated region
    $region66: #{tpu_custom_call.1} parent=1 // pred_check
      %p132 = pneg %p131
    $region67: #{tpu_custom_call.1} parent=1 // pred_check_branch
      %134 = sbr.rel (%p132) target = $region69
    $region68: #{tpu_custom_call.1} parent=1 // pred_region
      %v135 = vld [vmem:[#allocation3] sm:$0xff]
      %v136 = vld [vmem:[#allocation3 + $0x8] sm:$0xff]
      %v137 = vld [vmem:[#allocation9] sm:$0x1]
      %v139 = vlaneseq
      %v140 = vshrl.u32 %v139, 7
      %v141 = vsub.s32 0, %v140
      %v142 = vrot.slane %v137, %v141
      %v144 = vmul.f32 %v135, %v142
      %v145 = vmul.f32 %v136, %v142
      %v146 = vld [vmem:[#allocation11] sm:$0x1]
      %v148 = vlaneseq
      %v149 = vshrl.u32 %v148, 7
      %v150 = vsub.s32 0, %v149
      %v151 = vrot.slane %v146, %v150
      %v153 = vadd.f32 %v144, %v151
      %v154 = vadd.f32 %v145, %v151
      %v155 = vld [vmem:[#allocation8] sm:$0xff]
      %v156 = vld [vmem:[#allocation8 + $0x8] sm:$0xff]
      %v157 = vld [vmem:[#allocation8 + $0x10] sm:$0xff]
      %v158 = vld [vmem:[#allocation8 + $0x18] sm:$0xff]
      %v159 = vld [vmem:[#allocation8 + $0x20] sm:$0xff]
      %v160 = vld [vmem:[#allocation8 + $0x28] sm:$0xff]
      %v161 = vld [vmem:[#allocation8 + $0x30] sm:$0xff]
      %v162 = vld [vmem:[#allocation8 + $0x38] sm:$0xff]
      %v163 = vld [vmem:[#allocation8 + $0x40] sm:$0xff]
      %v164 = vld [vmem:[#allocation8 + $0x48] sm:$0xff]
      %v165 = vld [vmem:[#allocation8 + $0x50] sm:$0xff]
      %v166 = vld [vmem:[#allocation8 + $0x58] sm:$0xff]
      %v167 = vld [vmem:[#allocation8 + $0x60] sm:$0xff]
      %v168 = vld [vmem:[#allocation8 + $0x68] sm:$0xff]
      %v169 = vld [vmem:[#allocation8 + $0x70] sm:$0xff]
      %v170 = vld [vmem:[#allocation8 + $0x78] sm:$0xff]
      %v171 = vld [vmem:[#allocation8 + $0x80] sm:$0xff]
      %v172 = vld [vmem:[#allocation8 + $0x88] sm:$0xff]
      %v173 = vld [vmem:[#allocation8 + $0x90] sm:$0xff]
      %v174 = vld [vmem:[#allocation8 + $0x98] sm:$0xff]
      %v175 = vld [vmem:[#allocation8 + $0xa0] sm:$0xff]
      %v176 = vld [vmem:[#allocation8 + $0xa8] sm:$0xff]
      %v177 = vld [vmem:[#allocation8 + $0xb0] sm:$0xff]
      %v178 = vld [vmem:[#allocation8 + $0xb8] sm:$0xff]
      %v179 = vld [vmem:[#allocation8 + $0xc0] sm:$0xff]
      %v180 = vld [vmem:[#allocation8 + $0xc8] sm:$0xff]
      %v181 = vld [vmem:[#allocation8 + $0xd0] sm:$0xff]
      %v182 = vld [vmem:[#allocation8 + $0xd8] sm:$0xff]
      %v183 = vld [vmem:[#allocation8 + $0xe0] sm:$0xff]
      %v184 = vld [vmem:[#allocation8 + $0xe8] sm:$0xff]
      %v185 = vld [vmem:[#allocation8 + $0xf0] sm:$0xff]
      %v186 = vld [vmem:[#allocation8 + $0xf8] sm:$0xff]
      %v187 = vld [vmem:[#allocation8 + $0x100] sm:$0xff]
      %v188 = vld [vmem:[#allocation8 + $0x108] sm:$0xff]
      %v189 = vld [vmem:[#allocation8 + $0x110] sm:$0xff]
      %v190 = vld [vmem:[#allocation8 + $0x118] sm:$0xff]
      %v191 = vld [vmem:[#allocation8 + $0x120] sm:$0xff]
      %v192 = vld [vmem:[#allocation8 + $0x128] sm:$0xff]
      %v193 = vld [vmem:[#allocation8 + $0x130] sm:$0xff]
      %v194 = vld [vmem:[#allocation8 + $0x138] sm:$0xff]
      %v195 = vld [vmem:[#allocation8 + $0x140] sm:$0xff]
      %v196 = vld [vmem:[#allocation8 + $0x148] sm:$0xff]
      %v197 = vld [vmem:[#allocation8 + $0x150] sm:$0xff]
      %v198 = vld [vmem:[#allocation8 + $0x158] sm:$0xff]
      %v199 = vld [vmem:[#allocation8 + $0x160] sm:$0xff]
      %v200 = vld [vmem:[#allocation8 + $0x168] sm:$0xff]
      %v201 = vld [vmem:[#allocation8 + $0x170] sm:$0xff]
      %v202 = vld [vmem:[#allocation8 + $0x178] sm:$0xff]
      %v203 = vld [vmem:[#allocation8 + $0x180] sm:$0xff]
      %v204 = vld [vmem:[#allocation8 + $0x188] sm:$0xff]
      %v205 = vld [vmem:[#allocation8 + $0x190] sm:$0xff]
      %v206 = vld [vmem:[#allocation8 + $0x198] sm:$0xff]
      %v207 = vld [vmem:[#allocation8 + $0x1a0] sm:$0xff]
      %v208 = vld [vmem:[#allocation8 + $0x1a8] sm:$0xff]
      %v209 = vld [vmem:[#allocation8 + $0x1b0] sm:$0xff]
      %v210 = vld [vmem:[#allocation8 + $0x1b8] sm:$0xff]
      %v211 = vld [vmem:[#allocation8 + $0x1c0] sm:$0xff]
      %v212 = vld [vmem:[#allocation8 + $0x1c8] sm:$0xff]
      %v213 = vld [vmem:[#allocation8 + $0x1d0] sm:$0xff]
      %v214 = vld [vmem:[#allocation8 + $0x1d8] sm:$0xff]
      %v215 = vld [vmem:[#allocation8 + $0x1e0] sm:$0xff]
      %v216 = vld [vmem:[#allocation8 + $0x1e8] sm:$0xff]
      %v217 = vld [vmem:[#allocation8 + $0x1f0] sm:$0xff]
      %v218 = vld [vmem:[#allocation8 + $0x1f8] sm:$0xff]
      %v219 = vld [vmem:[#allocation8 + $0x200] sm:$0xff]
      %v220 = vld [vmem:[#allocation8 + $0x208] sm:$0xff]
      %v221 = vld [vmem:[#allocation8 + $0x210] sm:$0xff]
      %v222 = vld [vmem:[#allocation8 + $0x218] sm:$0xff]
      %v223 = vld [vmem:[#allocation8 + $0x220] sm:$0xff]
      %v224 = vld [vmem:[#allocation8 + $0x228] sm:$0xff]
      %v225 = vld [vmem:[#allocation8 + $0x230] sm:$0xff]
      %v226 = vld [vmem:[#allocation8 + $0x238] sm:$0xff]
      %v227 = vld [vmem:[#allocation8 + $0x240] sm:$0xff]
      %v228 = vld [vmem:[#allocation8 + $0x248] sm:$0xff]
      %v229 = vld [vmem:[#allocation8 + $0x250] sm:$0xff]
      %v230 = vld [vmem:[#allocation8 + $0x258] sm:$0xff]
      %v231 = vld [vmem:[#allocation8 + $0x260] sm:$0xff]
      %v232 = vld [vmem:[#allocation8 + $0x268] sm:$0xff]
      %v233 = vld [vmem:[#allocation8 + $0x270] sm:$0xff]
      %v234 = vld [vmem:[#allocation8 + $0x278] sm:$0xff]
      %v235 = vld [vmem:[#allocation8 + $0x280] sm:$0xff]
      %v236 = vld [vmem:[#allocation8 + $0x288] sm:$0xff]
      %v237 = vld [vmem:[#allocation8 + $0x290] sm:$0xff]
      %v238 = vld [vmem:[#allocation8 + $0x298] sm:$0xff]
      %v239 = vld [vmem:[#allocation8 + $0x2a0] sm:$0xff]
      %v240 = vld [vmem:[#allocation8 + $0x2a8] sm:$0xff]
      %v241 = vld [vmem:[#allocation8 + $0x2b0] sm:$0xff]
      %v242 = vld [vmem:[#allocation8 + $0x2b8] sm:$0xff]
      %v243 = vld [vmem:[#allocation8 + $0x2c0] sm:$0xff]
      %v244 = vld [vmem:[#allocation8 + $0x2c8] sm:$0xff]
      %v245 = vld [vmem:[#allocation8 + $0x2d0] sm:$0xff]
      %v246 = vld [vmem:[#allocation8 + $0x2d8] sm:$0xff]
      %v247 = vld [vmem:[#allocation8 + $0x2e0] sm:$0xff]
      %v248 = vld [vmem:[#allocation8 + $0x2e8] sm:$0xff]
      %v249 = vld [vmem:[#allocation8 + $0x2f0] sm:$0xff]
      %v250 = vld [vmem:[#allocation8 + $0x2f8] sm:$0xff]
      %v251 = vld [vmem:[#allocation8 + $0x300] sm:$0xff]
      %v252 = vld [vmem:[#allocation8 + $0x308] sm:$0xff]
      %v253 = vld [vmem:[#allocation8 + $0x310] sm:$0xff]
      %v254 = vld [vmem:[#allocation8 + $0x318] sm:$0xff]
      %v255 = vld [vmem:[#allocation8 + $0x320] sm:$0xff]
      %v256 = vld [vmem:[#allocation8 + $0x328] sm:$0xff]
      %v257 = vld [vmem:[#allocation8 + $0x330] sm:$0xff]
      %v258 = vld [vmem:[#allocation8 + $0x338] sm:$0xff]
      %v259 = vld [vmem:[#allocation8 + $0x340] sm:$0xff]
      %v260 = vld [vmem:[#allocation8 + $0x348] sm:$0xff]
      %v261 = vld [vmem:[#allocation8 + $0x350] sm:$0xff]
      %v262 = vld [vmem:[#allocation8 + $0x358] sm:$0xff]
      %v263 = vld [vmem:[#allocation8 + $0x360] sm:$0xff]
      %v264 = vld [vmem:[#allocation8 + $0x368] sm:$0xff]
      %v265 = vld [vmem:[#allocation8 + $0x370] sm:$0xff]
      %v266 = vld [vmem:[#allocation8 + $0x378] sm:$0xff]
      %v267 = vld [vmem:[#allocation8 + $0x380] sm:$0xff]
      %v268 = vld [vmem:[#allocation8 + $0x388] sm:$0xff]
      %v269 = vld [vmem:[#allocation8 + $0x390] sm:$0xff]
      %v270 = vld [vmem:[#allocation8 + $0x398] sm:$0xff]
      %v271 = vld [vmem:[#allocation8 + $0x3a0] sm:$0xff]
      %v272 = vld [vmem:[#allocation8 + $0x3a8] sm:$0xff]
      %v273 = vld [vmem:[#allocation8 + $0x3b0] sm:$0xff]
      %v274 = vld [vmem:[#allocation8 + $0x3b8] sm:$0xff]
      %v275 = vld [vmem:[#allocation8 + $0x3c0] sm:$0xff]
      %v276 = vld [vmem:[#allocation8 + $0x3c8] sm:$0xff]
      %v277 = vld [vmem:[#allocation8 + $0x3d0] sm:$0xff]
      %v278 = vld [vmem:[#allocation8 + $0x3d8] sm:$0xff]
      %v279 = vld [vmem:[#allocation8 + $0x3e0] sm:$0xff]
      %v280 = vld [vmem:[#allocation8 + $0x3e8] sm:$0xff]
      %v281 = vld [vmem:[#allocation8 + $0x3f0] sm:$0xff]
      %v282 = vld [vmem:[#allocation8 + $0x3f8] sm:$0xff]
      %v283 = vld [vmem:[#allocation8 + $0x400] sm:$0xff]
      %v284 = vld [vmem:[#allocation8 + $0x408] sm:$0xff]
      %v285 = vld [vmem:[#allocation8 + $0x410] sm:$0xff]
      %v286 = vld [vmem:[#allocation8 + $0x418] sm:$0xff]
      %v287 = vld [vmem:[#allocation8 + $0x420] sm:$0xff]
      %v288 = vld [vmem:[#allocation8 + $0x428] sm:$0xff]
      %v289 = vld [vmem:[#allocation8 + $0x430] sm:$0xff]
      %v290 = vld [vmem:[#allocation8 + $0x438] sm:$0xff]
      %v291 = vld [vmem:[#allocation8 + $0x440] sm:$0xff]
      %v292 = vld [vmem:[#allocation8 + $0x448] sm:$0xff]
      %v293 = vld [vmem:[#allocation8 + $0x450] sm:$0xff]
      %v294 = vld [vmem:[#allocation8 + $0x458] sm:$0xff]
      %v295 = vld [vmem:[#allocation8 + $0x460] sm:$0xff]
      %v296 = vld [vmem:[#allocation8 + $0x468] sm:$0xff]
      %v297 = vld [vmem:[#allocation8 + $0x470] sm:$0xff]
      %v298 = vld [vmem:[#allocation8 + $0x478] sm:$0xff]
      %v299 = vld [vmem:[#allocation8 + $0x480] sm:$0xff]
      %v300 = vld [vmem:[#allocation8 + $0x488] sm:$0xff]
      %v301 = vld [vmem:[#allocation8 + $0x490] sm:$0xff]
      %v302 = vld [vmem:[#allocation8 + $0x498] sm:$0xff]
      %v303 = vld [vmem:[#allocation8 + $0x4a0] sm:$0xff]
      %v304 = vld [vmem:[#allocation8 + $0x4a8] sm:$0xff]
      %v305 = vld [vmem:[#allocation8 + $0x4b0] sm:$0xff]
      %v306 = vld [vmem:[#allocation8 + $0x4b8] sm:$0xff]
      %v307 = vld [vmem:[#allocation8 + $0x4c0] sm:$0xff]
      %v308 = vld [vmem:[#allocation8 + $0x4c8] sm:$0xff]
      %v309 = vld [vmem:[#allocation8 + $0x4d0] sm:$0xff]
      %v310 = vld [vmem:[#allocation8 + $0x4d8] sm:$0xff]
      %v311 = vld [vmem:[#allocation8 + $0x4e0] sm:$0xff]
      %v312 = vld [vmem:[#allocation8 + $0x4e8] sm:$0xff]
      %v313 = vld [vmem:[#allocation8 + $0x4f0] sm:$0xff]
      %v314 = vld [vmem:[#allocation8 + $0x4f8] sm:$0xff]
      %v315 = vld [vmem:[#allocation8 + $0x500] sm:$0xff]
      %v316 = vld [vmem:[#allocation8 + $0x508] sm:$0xff]
      %v317 = vld [vmem:[#allocation8 + $0x510] sm:$0xff]
      %v318 = vld [vmem:[#allocation8 + $0x518] sm:$0xff]
      %v319 = vld [vmem:[#allocation8 + $0x520] sm:$0xff]
      %v320 = vld [vmem:[#allocation8 + $0x528] sm:$0xff]
      %v321 = vld [vmem:[#allocation8 + $0x530] sm:$0xff]
      %v322 = vld [vmem:[#allocation8 + $0x538] sm:$0xff]
      %v323 = vld [vmem:[#allocation8 + $0x540] sm:$0xff]
      %v324 = vld [vmem:[#allocation8 + $0x548] sm:$0xff]
      %v325 = vld [vmem:[#allocation8 + $0x550] sm:$0xff]
      %v326 = vld [vmem:[#allocation8 + $0x558] sm:$0xff]
      %v327 = vld [vmem:[#allocation8 + $0x560] sm:$0xff]
      %v328 = vld [vmem:[#allocation8 + $0x568] sm:$0xff]
      %v329 = vld [vmem:[#allocation8 + $0x570] sm:$0xff]
      %v330 = vld [vmem:[#allocation8 + $0x578] sm:$0xff]
      %v331 = vld [vmem:[#allocation8 + $0x580] sm:$0xff]
      %v332 = vld [vmem:[#allocation8 + $0x588] sm:$0xff]
      %v333 = vld [vmem:[#allocation8 + $0x590] sm:$0xff]
      %v334 = vld [vmem:[#allocation8 + $0x598] sm:$0xff]
      %v335 = vld [vmem:[#allocation8 + $0x5a0] sm:$0xff]
      %v336 = vld [vmem:[#allocation8 + $0x5a8] sm:$0xff]
      %v337 = vld [vmem:[#allocation8 + $0x5b0] sm:$0xff]
      %v338 = vld [vmem:[#allocation8 + $0x5b8] sm:$0xff]
      %v339 = vld [vmem:[#allocation8 + $0x5c0] sm:$0xff]
      %v340 = vld [vmem:[#allocation8 + $0x5c8] sm:$0xff]
      %v341 = vld [vmem:[#allocation8 + $0x5d0] sm:$0xff]
      %v342 = vld [vmem:[#allocation8 + $0x5d8] sm:$0xff]
      %v343 = vld [vmem:[#allocation8 + $0x5e0] sm:$0xff]
      %v344 = vld [vmem:[#allocation8 + $0x5e8] sm:$0xff]
      %v345 = vld [vmem:[#allocation8 + $0x5f0] sm:$0xff]
      %v346 = vld [vmem:[#allocation8 + $0x5f8] sm:$0xff]
      %v347 = vld [vmem:[#allocation8 + $0x600] sm:$0xff]
      %v348 = vld [vmem:[#allocation8 + $0x608] sm:$0xff]
      %v349 = vld [vmem:[#allocation8 + $0x610] sm:$0xff]
      %v350 = vld [vmem:[#allocation8 + $0x618] sm:$0xff]
      %v351 = vld [vmem:[#allocation8 + $0x620] sm:$0xff]
      %v352 = vld [vmem:[#allocation8 + $0x628] sm:$0xff]
      %v353 = vld [vmem:[#allocation8 + $0x630] sm:$0xff]
      %v354 = vld [vmem:[#allocation8 + $0x638] sm:$0xff]
      %v355 = vld [vmem:[#allocation8 + $0x640] sm:$0xff]
      %v356 = vld [vmem:[#allocation8 + $0x648] sm:$0xff]
      %v357 = vld [vmem:[#allocation8 + $0x650] sm:$0xff]
      %v358 = vld [vmem:[#allocation8 + $0x658] sm:$0xff]
      %v359 = vld [vmem:[#allocation8 + $0x660] sm:$0xff]
      %v360 = vld [vmem:[#allocation8 + $0x668] sm:$0xff]
      %v361 = vld [vmem:[#allocation8 + $0x670] sm:$0xff]
      %v362 = vld [vmem:[#allocation8 + $0x678] sm:$0xff]
      %v363 = vld [vmem:[#allocation8 + $0x680] sm:$0xff]
      %v364 = vld [vmem:[#allocation8 + $0x688] sm:$0xff]
      %v365 = vld [vmem:[#allocation8 + $0x690] sm:$0xff]
      %v366 = vld [vmem:[#allocation8 + $0x698] sm:$0xff]
      %v367 = vld [vmem:[#allocation8 + $0x6a0] sm:$0xff]
      %v368 = vld [vmem:[#allocation8 + $0x6a8] sm:$0xff]
      %v369 = vld [vmem:[#allocation8 + $0x6b0] sm:$0xff]
      %v370 = vld [vmem:[#allocation8 + $0x6b8] sm:$0xff]
      %v371 = vld [vmem:[#allocation8 + $0x6c0] sm:$0xff]
      %v372 = vld [vmem:[#allocation8 + $0x6c8] sm:$0xff]
      %v373 = vld [vmem:[#allocation8 + $0x6d0] sm:$0xff]
      %v374 = vld [vmem:[#allocation8 + $0x6d8] sm:$0xff]
      %v375 = vld [vmem:[#allocation8 + $0x6e0] sm:$0xff]
      %v376 = vld [vmem:[#allocation8 + $0x6e8] sm:$0xff]
      %v377 = vld [vmem:[#allocation8 + $0x6f0] sm:$0xff]
      %v378 = vld [vmem:[#allocation8 + $0x6f8] sm:$0xff]
      %v379 = vld [vmem:[#allocation8 + $0x700] sm:$0xff]
      %v380 = vld [vmem:[#allocation8 + $0x708] sm:$0xff]
      %v381 = vld [vmem:[#allocation8 + $0x710] sm:$0xff]
      %v382 = vld [vmem:[#allocation8 + $0x718] sm:$0xff]
      %v383 = vld [vmem:[#allocation8 + $0x720] sm:$0xff]
      %v384 = vld [vmem:[#allocation8 + $0x728] sm:$0xff]
      %v385 = vld [vmem:[#allocation8 + $0x730] sm:$0xff]
      %v386 = vld [vmem:[#allocation8 + $0x738] sm:$0xff]
      %v387 = vld [vmem:[#allocation8 + $0x740] sm:$0xff]
      %v388 = vld [vmem:[#allocation8 + $0x748] sm:$0xff]
      %v389 = vld [vmem:[#allocation8 + $0x750] sm:$0xff]
      %v390 = vld [vmem:[#allocation8 + $0x758] sm:$0xff]
      %v391 = vld [vmem:[#allocation8 + $0x760] sm:$0xff]
      %v392 = vld [vmem:[#allocation8 + $0x768] sm:$0xff]
      %v393 = vld [vmem:[#allocation8 + $0x770] sm:$0xff]
      %v394 = vld [vmem:[#allocation8 + $0x778] sm:$0xff]
      %v395 = vld [vmem:[#allocation8 + $0x780] sm:$0xff]
      %v396 = vld [vmem:[#allocation8 + $0x788] sm:$0xff]
      %v397 = vld [vmem:[#allocation8 + $0x790] sm:$0xff]
      %v398 = vld [vmem:[#allocation8 + $0x798] sm:$0xff]
      %v399 = vld [vmem:[#allocation8 + $0x7a0] sm:$0xff]
      %v400 = vld [vmem:[#allocation8 + $0x7a8] sm:$0xff]
      %v401 = vld [vmem:[#allocation8 + $0x7b0] sm:$0xff]
      %v402 = vld [vmem:[#allocation8 + $0x7b8] sm:$0xff]
      %v403 = vld [vmem:[#allocation8 + $0x7c0] sm:$0xff]
      %v404 = vld [vmem:[#allocation8 + $0x7c8] sm:$0xff]
      %v405 = vld [vmem:[#allocation8 + $0x7d0] sm:$0xff]
      %v406 = vld [vmem:[#allocation8 + $0x7d8] sm:$0xff]
      %v407 = vld [vmem:[#allocation8 + $0x7e0] sm:$0xff]
      %v408 = vld [vmem:[#allocation8 + $0x7e8] sm:$0xff]
      %v409 = vld [vmem:[#allocation8 + $0x7f0] sm:$0xff]
      %v410 = vld [vmem:[#allocation8 + $0x7f8] sm:$0xff]
      %v411 = vld [vmem:[#allocation8 + $0x800] sm:$0xff]
      %v412 = vld [vmem:[#allocation8 + $0x808] sm:$0xff]
      %v413 = vld [vmem:[#allocation8 + $0x810] sm:$0xff]
      %v414 = vld [vmem:[#allocation8 + $0x818] sm:$0xff]
      %v415 = vld [vmem:[#allocation8 + $0x820] sm:$0xff]
      %v416 = vld [vmem:[#allocation8 + $0x828] sm:$0xff]
      %v417 = vld [vmem:[#allocation8 + $0x830] sm:$0xff]
      %v418 = vld [vmem:[#allocation8 + $0x838] sm:$0xff]
      %v419 = vld [vmem:[#allocation8 + $0x840] sm:$0xff]
      %v420 = vld [vmem:[#allocation8 + $0x848] sm:$0xff]
      %v421 = vld [vmem:[#allocation8 + $0x850] sm:$0xff]
      %v422 = vld [vmem:[#allocation8 + $0x858] sm:$0xff]
      %v423 = vld [vmem:[#allocation8 + $0x860] sm:$0xff]
      %v424 = vld [vmem:[#allocation8 + $0x868] sm:$0xff]
      %v425 = vld [vmem:[#allocation8 + $0x870] sm:$0xff]
      %v426 = vld [vmem:[#allocation8 + $0x878] sm:$0xff]
      %v427 = vld [vmem:[#allocation8 + $0x880] sm:$0xff]
      %v428 = vld [vmem:[#allocation8 + $0x888] sm:$0xff]
      %v429 = vld [vmem:[#allocation8 + $0x890] sm:$0xff]
      %v430 = vld [vmem:[#allocation8 + $0x898] sm:$0xff]
      %v431 = vld [vmem:[#allocation8 + $0x8a0] sm:$0xff]
      %v432 = vld [vmem:[#allocation8 + $0x8a8] sm:$0xff]
      %v433 = vld [vmem:[#allocation8 + $0x8b0] sm:$0xff]
      %v434 = vld [vmem:[#allocation8 + $0x8b8] sm:$0xff]
      %v435 = vld [vmem:[#allocation8 + $0x8c0] sm:$0xff]
      %v436 = vld [vmem:[#allocation8 + $0x8c8] sm:$0xff]
      %v437 = vld [vmem:[#allocation8 + $0x8d0] sm:$0xff]
      %v438 = vld [vmem:[#allocation8 + $0x8d8] sm:$0xff]
      %v439 = vld [vmem:[#allocation8 + $0x8e0] sm:$0xff]
      %v440 = vld [vmem:[#allocation8 + $0x8e8] sm:$0xff]
      %v441 = vld [vmem:[#allocation8 + $0x8f0] sm:$0xff]
      %v442 = vld [vmem:[#allocation8 + $0x8f8] sm:$0xff]
      %v443 = vld [vmem:[#allocation8 + $0x900] sm:$0xff]
      %v444 = vld [vmem:[#allocation8 + $0x908] sm:$0xff]
      %v445 = vld [vmem:[#allocation8 + $0x910] sm:$0xff]
      %v446 = vld [vmem:[#allocation8 + $0x918] sm:$0xff]
      %v447 = vld [vmem:[#allocation8 + $0x920] sm:$0xff]
      %v448 = vld [vmem:[#allocation8 + $0x928] sm:$0xff]
      %v449 = vld [vmem:[#allocation8 + $0x930] sm:$0xff]
      %v450 = vld [vmem:[#allocation8 + $0x938] sm:$0xff]
      %v451 = vld [vmem:[#allocation8 + $0x940] sm:$0xff]
      %v452 = vld [vmem:[#allocation8 + $0x948] sm:$0xff]
      %v453 = vld [vmem:[#allocation8 + $0x950] sm:$0xff]
      %v454 = vld [vmem:[#allocation8 + $0x958] sm:$0xff]
      %v455 = vld [vmem:[#allocation8 + $0x960] sm:$0xff]
      %v456 = vld [vmem:[#allocation8 + $0x968] sm:$0xff]
      %v457 = vld [vmem:[#allocation8 + $0x970] sm:$0xff]
      %v458 = vld [vmem:[#allocation8 + $0x978] sm:$0xff]
      %v459 = vld [vmem:[#allocation8 + $0x980] sm:$0xff]
      %v460 = vld [vmem:[#allocation8 + $0x988] sm:$0xff]
      %v461 = vld [vmem:[#allocation8 + $0x990] sm:$0xff]
      %v462 = vld [vmem:[#allocation8 + $0x998] sm:$0xff]
      %v463 = vld [vmem:[#allocation8 + $0x9a0] sm:$0xff]
      %v464 = vld [vmem:[#allocation8 + $0x9a8] sm:$0xff]
      %v465 = vld [vmem:[#allocation8 + $0x9b0] sm:$0xff]
      %v466 = vld [vmem:[#allocation8 + $0x9b8] sm:$0xff]
      %v467 = vld [vmem:[#allocation8 + $0x9c0] sm:$0xff]
      %v468 = vld [vmem:[#allocation8 + $0x9c8] sm:$0xff]
      %v469 = vld [vmem:[#allocation8 + $0x9d0] sm:$0xff]
      %v470 = vld [vmem:[#allocation8 + $0x9d8] sm:$0xff]
      %v471 = vld [vmem:[#allocation8 + $0x9e0] sm:$0xff]
      %v472 = vld [vmem:[#allocation8 + $0x9e8] sm:$0xff]
      %v473 = vld [vmem:[#allocation8 + $0x9f0] sm:$0xff]
      %v474 = vld [vmem:[#allocation8 + $0x9f8] sm:$0xff]
      %v475 = vld [vmem:[#allocation8 + $0xa00] sm:$0xff]
      %v476 = vld [vmem:[#allocation8 + $0xa08] sm:$0xff]
      %v477 = vld [vmem:[#allocation8 + $0xa10] sm:$0xff]
      %v478 = vld [vmem:[#allocation8 + $0xa18] sm:$0xff]
      %v479 = vld [vmem:[#allocation8 + $0xa20] sm:$0xff]
      %v480 = vld [vmem:[#allocation8 + $0xa28] sm:$0xff]
      %v481 = vld [vmem:[#allocation8 + $0xa30] sm:$0xff]
      %v482 = vld [vmem:[#allocation8 + $0xa38] sm:$0xff]
      %v483 = vld [vmem:[#allocation8 + $0xa40] sm:$0xff]
      %v484 = vld [vmem:[#allocation8 + $0xa48] sm:$0xff]
      %v485 = vld [vmem:[#allocation8 + $0xa50] sm:$0xff]
      %v486 = vld [vmem:[#allocation8 + $0xa58] sm:$0xff]
      %v487 = vld [vmem:[#allocation8 + $0xa60] sm:$0xff]
      %v488 = vld [vmem:[#allocation8 + $0xa68] sm:$0xff]
      %v489 = vld [vmem:[#allocation8 + $0xa70] sm:$0xff]
      %v490 = vld [vmem:[#allocation8 + $0xa78] sm:$0xff]
      %v491 = vld [vmem:[#allocation8 + $0xa80] sm:$0xff]
      %v492 = vld [vmem:[#allocation8 + $0xa88] sm:$0xff]
      %v493 = vld [vmem:[#allocation8 + $0xa90] sm:$0xff]
      %v494 = vld [vmem:[#allocation8 + $0xa98] sm:$0xff]
      %v495 = vld [vmem:[#allocation8 + $0xaa0] sm:$0xff]
      %v496 = vld [vmem:[#allocation8 + $0xaa8] sm:$0xff]
      %v497 = vld [vmem:[#allocation8 + $0xab0] sm:$0xff]
      %v498 = vld [vmem:[#allocation8 + $0xab8] sm:$0xff]
      %v499 = vld [vmem:[#allocation8 + $0xac0] sm:$0xff]
      %v500 = vld [vmem:[#allocation8 + $0xac8] sm:$0xff]
      %v501 = vld [vmem:[#allocation8 + $0xad0] sm:$0xff]
      %v502 = vld [vmem:[#allocation8 + $0xad8] sm:$0xff]
      %v503 = vld [vmem:[#allocation8 + $0xae0] sm:$0xff]
      %v504 = vld [vmem:[#allocation8 + $0xae8] sm:$0xff]
      %v505 = vld [vmem:[#allocation8 + $0xaf0] sm:$0xff]
      %v506 = vld [vmem:[#allocation8 + $0xaf8] sm:$0xff]
      %v507 = vld [vmem:[#allocation8 + $0xb00] sm:$0xff]
      %v508 = vld [vmem:[#allocation8 + $0xb08] sm:$0xff]
      %v509 = vld [vmem:[#allocation8 + $0xb10] sm:$0xff]
      %v510 = vld [vmem:[#allocation8 + $0xb18] sm:$0xff]
      %v511 = vld [vmem:[#allocation8 + $0xb20] sm:$0xff]
      %v512 = vld [vmem:[#allocation8 + $0xb28] sm:$0xff]
      %v513 = vld [vmem:[#allocation8 + $0xb30] sm:$0xff]
      %v514 = vld [vmem:[#allocation8 + $0xb38] sm:$0xff]
      %v515 = vld [vmem:[#allocation8 + $0xb40] sm:$0xff]
      %v516 = vld [vmem:[#allocation8 + $0xb48] sm:$0xff]
      %v517 = vld [vmem:[#allocation8 + $0xb50] sm:$0xff]
      %v518 = vld [vmem:[#allocation8 + $0xb58] sm:$0xff]
      %v519 = vld [vmem:[#allocation8 + $0xb60] sm:$0xff]
      %v520 = vld [vmem:[#allocation8 + $0xb68] sm:$0xff]
      %v521 = vld [vmem:[#allocation8 + $0xb70] sm:$0xff]
      %v522 = vld [vmem:[#allocation8 + $0xb78] sm:$0xff]
      %v523 = vld [vmem:[#allocation8 + $0xb80] sm:$0xff]
      %v524 = vld [vmem:[#allocation8 + $0xb88] sm:$0xff]
      %v525 = vld [vmem:[#allocation8 + $0xb90] sm:$0xff]
      %v526 = vld [vmem:[#allocation8 + $0xb98] sm:$0xff]
      %v527 = vld [vmem:[#allocation8 + $0xba0] sm:$0xff]
      %v528 = vld [vmem:[#allocation8 + $0xba8] sm:$0xff]
      %v529 = vld [vmem:[#allocation8 + $0xbb0] sm:$0xff]
      %v530 = vld [vmem:[#allocation8 + $0xbb8] sm:$0xff]
      %v531 = vld [vmem:[#allocation8 + $0xbc0] sm:$0xff]
      %v532 = vld [vmem:[#allocation8 + $0xbc8] sm:$0xff]
      %v533 = vld [vmem:[#allocation8 + $0xbd0] sm:$0xff]
      %v534 = vld [vmem:[#allocation8 + $0xbd8] sm:$0xff]
      %v535 = vld [vmem:[#allocation8 + $0xbe0] sm:$0xff]
      %v536 = vld [vmem:[#allocation8 + $0xbe8] sm:$0xff]
      %v537 = vld [vmem:[#allocation8 + $0xbf0] sm:$0xff]
      %v538 = vld [vmem:[#allocation8 + $0xbf8] sm:$0xff]
      %v539 = vld [vmem:[#allocation8 + $0xc00] sm:$0xff]
      %v540 = vld [vmem:[#allocation8 + $0xc08] sm:$0xff]
      %v541 = vld [vmem:[#allocation8 + $0xc10] sm:$0xff]
      %v542 = vld [vmem:[#allocation8 + $0xc18] sm:$0xff]
      %v543 = vld [vmem:[#allocation8 + $0xc20] sm:$0xff]
      %v544 = vld [vmem:[#allocation8 + $0xc28] sm:$0xff]
      %v545 = vld [vmem:[#allocation8 + $0xc30] sm:$0xff]
      %v546 = vld [vmem:[#allocation8 + $0xc38] sm:$0xff]
      %v547 = vld [vmem:[#allocation8 + $0xc40] sm:$0xff]
      %v548 = vld [vmem:[#allocation8 + $0xc48] sm:$0xff]
      %v549 = vld [vmem:[#allocation8 + $0xc50] sm:$0xff]
      %v550 = vld [vmem:[#allocation8 + $0xc58] sm:$0xff]
      %v551 = vld [vmem:[#allocation8 + $0xc60] sm:$0xff]
      %v552 = vld [vmem:[#allocation8 + $0xc68] sm:$0xff]
      %v553 = vld [vmem:[#allocation8 + $0xc70] sm:$0xff]
      %v554 = vld [vmem:[#allocation8 + $0xc78] sm:$0xff]
      %v555 = vld [vmem:[#allocation8 + $0xc80] sm:$0xff]
      %v556 = vld [vmem:[#allocation8 + $0xc88] sm:$0xff]
      %v557 = vld [vmem:[#allocation8 + $0xc90] sm:$0xff]
      %v558 = vld [vmem:[#allocation8 + $0xc98] sm:$0xff]
      %v559 = vld [vmem:[#allocation8 + $0xca0] sm:$0xff]
      %v560 = vld [vmem:[#allocation8 + $0xca8] sm:$0xff]
      %v561 = vld [vmem:[#allocation8 + $0xcb0] sm:$0xff]
      %v562 = vld [vmem:[#allocation8 + $0xcb8] sm:$0xff]
      %v563 = vld [vmem:[#allocation8 + $0xcc0] sm:$0xff]
      %v564 = vld [vmem:[#allocation8 + $0xcc8] sm:$0xff]
      %v565 = vld [vmem:[#allocation8 + $0xcd0] sm:$0xff]
      %v566 = vld [vmem:[#allocation8 + $0xcd8] sm:$0xff]
      %v567 = vld [vmem:[#allocation8 + $0xce0] sm:$0xff]
      %v568 = vld [vmem:[#allocation8 + $0xce8] sm:$0xff]
      %v569 = vld [vmem:[#allocation8 + $0xcf0] sm:$0xff]
      %v570 = vld [vmem:[#allocation8 + $0xcf8] sm:$0xff]
      %v571 = vld [vmem:[#allocation8 + $0xd00] sm:$0xff]
      %v572 = vld [vmem:[#allocation8 + $0xd08] sm:$0xff]
      %v573 = vld [vmem:[#allocation8 + $0xd10] sm:$0xff]
      %v574 = vld [vmem:[#allocation8 + $0xd18] sm:$0xff]
      %v575 = vld [vmem:[#allocation8 + $0xd20] sm:$0xff]
      %v576 = vld [vmem:[#allocation8 + $0xd28] sm:$0xff]
      %v577 = vld [vmem:[#allocation8 + $0xd30] sm:$0xff]
      %v578 = vld [vmem:[#allocation8 + $0xd38] sm:$0xff]
      %v579 = vld [vmem:[#allocation8 + $0xd40] sm:$0xff]
      %v580 = vld [vmem:[#allocation8 + $0xd48] sm:$0xff]
      %v581 = vld [vmem:[#allocation8 + $0xd50] sm:$0xff]
      %v582 = vld [vmem:[#allocation8 + $0xd58] sm:$0xff]
      %v583 = vld [vmem:[#allocation8 + $0xd60] sm:$0xff]
      %v584 = vld [vmem:[#allocation8 + $0xd68] sm:$0xff]
      %v585 = vld [vmem:[#allocation8 + $0xd70] sm:$0xff]
      %v586 = vld [vmem:[#allocation8 + $0xd78] sm:$0xff]
      %v587 = vld [vmem:[#allocation8 + $0xd80] sm:$0xff]
      %v588 = vld [vmem:[#allocation8 + $0xd88] sm:$0xff]
      %v589 = vld [vmem:[#allocation8 + $0xd90] sm:$0xff]
      %v590 = vld [vmem:[#allocation8 + $0xd98] sm:$0xff]
      %v591 = vld [vmem:[#allocation8 + $0xda0] sm:$0xff]
      %v592 = vld [vmem:[#allocation8 + $0xda8] sm:$0xff]
      %v593 = vld [vmem:[#allocation8 + $0xdb0] sm:$0xff]
      %v594 = vld [vmem:[#allocation8 + $0xdb8] sm:$0xff]
      %v595 = vld [vmem:[#allocation8 + $0xdc0] sm:$0xff]
      %v596 = vld [vmem:[#allocation8 + $0xdc8] sm:$0xff]
      %v597 = vld [vmem:[#allocation8 + $0xdd0] sm:$0xff]
      %v598 = vld [vmem:[#allocation8 + $0xdd8] sm:$0xff]
      %v599 = vld [vmem:[#allocation8 + $0xde0] sm:$0xff]
      %v600 = vld [vmem:[#allocation8 + $0xde8] sm:$0xff]
      %v601 = vld [vmem:[#allocation8 + $0xdf0] sm:$0xff]
      %v602 = vld [vmem:[#allocation8 + $0xdf8] sm:$0xff]
      %v603 = vld [vmem:[#allocation8 + $0xe00] sm:$0xff]
      %v604 = vld [vmem:[#allocation8 + $0xe08] sm:$0xff]
      %v605 = vld [vmem:[#allocation8 + $0xe10] sm:$0xff]
      %v606 = vld [vmem:[#allocation8 + $0xe18] sm:$0xff]
      %v607 = vld [vmem:[#allocation8 + $0xe20] sm:$0xff]
      %v608 = vld [vmem:[#allocation8 + $0xe28] sm:$0xff]
      %v609 = vld [vmem:[#allocation8 + $0xe30] sm:$0xff]
      %v610 = vld [vmem:[#allocation8 + $0xe38] sm:$0xff]
      %v611 = vld [vmem:[#allocation8 + $0xe40] sm:$0xff]
      %v612 = vld [vmem:[#allocation8 + $0xe48] sm:$0xff]
      %v613 = vld [vmem:[#allocation8 + $0xe50] sm:$0xff]
      %v614 = vld [vmem:[#allocation8 + $0xe58] sm:$0xff]
      %v615 = vld [vmem:[#allocation8 + $0xe60] sm:$0xff]
      %v616 = vld [vmem:[#allocation8 + $0xe68] sm:$0xff]
      %v617 = vld [vmem:[#allocation8 + $0xe70] sm:$0xff]
      %v618 = vld [vmem:[#allocation8 + $0xe78] sm:$0xff]
      %v619 = vld [vmem:[#allocation8 + $0xe80] sm:$0xff]
      %v620 = vld [vmem:[#allocation8 + $0xe88] sm:$0xff]
      %v621 = vld [vmem:[#allocation8 + $0xe90] sm:$0xff]
      %v622 = vld [vmem:[#allocation8 + $0xe98] sm:$0xff]
      %v623 = vld [vmem:[#allocation8 + $0xea0] sm:$0xff]
      %v624 = vld [vmem:[#allocation8 + $0xea8] sm:$0xff]
      %v625 = vld [vmem:[#allocation8 + $0xeb0] sm:$0xff]
      %v626 = vld [vmem:[#allocation8 + $0xeb8] sm:$0xff]
      %v627 = vld [vmem:[#allocation8 + $0xec0] sm:$0xff]
      %v628 = vld [vmem:[#allocation8 + $0xec8] sm:$0xff]
      %v629 = vld [vmem:[#allocation8 + $0xed0] sm:$0xff]
      %v630 = vld [vmem:[#allocation8 + $0xed8] sm:$0xff]
      %v631 = vld [vmem:[#allocation8 + $0xee0] sm:$0xff]
      %v632 = vld [vmem:[#allocation8 + $0xee8] sm:$0xff]
      %v633 = vld [vmem:[#allocation8 + $0xef0] sm:$0xff]
      %v634 = vld [vmem:[#allocation8 + $0xef8] sm:$0xff]
      %v635 = vld [vmem:[#allocation8 + $0xf00] sm:$0xff]
      %v636 = vld [vmem:[#allocation8 + $0xf08] sm:$0xff]
      %v637 = vld [vmem:[#allocation8 + $0xf10] sm:$0xff]
      %v638 = vld [vmem:[#allocation8 + $0xf18] sm:$0xff]
      %v639 = vld [vmem:[#allocation8 + $0xf20] sm:$0xff]
      %v640 = vld [vmem:[#allocation8 + $0xf28] sm:$0xff]
      %v641 = vld [vmem:[#allocation8 + $0xf30] sm:$0xff]
      %v642 = vld [vmem:[#allocation8 + $0xf38] sm:$0xff]
      %v643 = vld [vmem:[#allocation8 + $0xf40] sm:$0xff]
      %v644 = vld [vmem:[#allocation8 + $0xf48] sm:$0xff]
      %v645 = vld [vmem:[#allocation8 + $0xf50] sm:$0xff]
      %v646 = vld [vmem:[#allocation8 + $0xf58] sm:$0xff]
      %v647 = vld [vmem:[#allocation8 + $0xf60] sm:$0xff]
      %v648 = vld [vmem:[#allocation8 + $0xf68] sm:$0xff]
      %v649 = vld [vmem:[#allocation8 + $0xf70] sm:$0xff]
      %v650 = vld [vmem:[#allocation8 + $0xf78] sm:$0xff]
      %v651 = vld [vmem:[#allocation8 + $0xf80] sm:$0xff]
      %v652 = vld [vmem:[#allocation8 + $0xf88] sm:$0xff]
      %v653 = vld [vmem:[#allocation8 + $0xf90] sm:$0xff]
      %v654 = vld [vmem:[#allocation8 + $0xf98] sm:$0xff]
      %v655 = vld [vmem:[#allocation8 + $0xfa0] sm:$0xff]
      %v656 = vld [vmem:[#allocation8 + $0xfa8] sm:$0xff]
      %v657 = vld [vmem:[#allocation8 + $0xfb0] sm:$0xff]
      %v658 = vld [vmem:[#allocation8 + $0xfb8] sm:$0xff]
      %v659 = vld [vmem:[#allocation8 + $0xfc0] sm:$0xff]
      %v660 = vld [vmem:[#allocation8 + $0xfc8] sm:$0xff]
      %v661 = vld [vmem:[#allocation8 + $0xfd0] sm:$0xff]
      %v662 = vld [vmem:[#allocation8 + $0xfd8] sm:$0xff]
      %v663 = vld [vmem:[#allocation8 + $0xfe0] sm:$0xff]
      %v664 = vld [vmem:[#allocation8 + $0xfe8] sm:$0xff]
      %v665 = vld [vmem:[#allocation8 + $0xff0] sm:$0xff]
      %v666 = vld [vmem:[#allocation8 + $0xff8] sm:$0xff]
      %667 = vmatprep.subr.mxu0 %v636
      %668 = vmatpush1.msra.mxu0 %v635
      %669 = vmatprep.subr.mxu0 %v604
      %670 = vmatpush1.msra.mxu0 %v603
      %671 = vmatprep.subr.mxu0 %v572
      %672 = vmatpush1.msra.mxu0 %v571
      %673 = vmatprep.subr.mxu0 %v540
      %674 = vmatpush1.msra.mxu0 %v539
      %675 = vmatprep.subr.mxu0 %v508
      %676 = vmatpush1.msra.mxu0 %v507
      %677 = vmatprep.subr.mxu0 %v476
      %678 = vmatpush1.msra.mxu0 %v475
      %679 = vmatprep.subr.mxu0 %v444
      %680 = vmatpush1.msra.mxu0 %v443
      %681 = vmatprep.subr.mxu0 %v412
      %682 = vmatpush1.msra.mxu0 %v411
      %683 = vmatprep.subr.mxu0 %v380
      %684 = vmatpush1.msra.mxu0 %v379
      %685 = vmatprep.subr.mxu0 %v348
      %686 = vmatpush1.msra.mxu0 %v347
      %687 = vmatprep.subr.mxu0 %v316
      %688 = vmatpush1.msra.mxu0 %v315
      %689 = vmatprep.subr.mxu0 %v284
      %690 = vmatpush1.msra.mxu0 %v283
      %691 = vmatprep.subr.mxu0 %v252
      %692 = vmatpush1.msra.mxu0 %v251
      %693 = vmatprep.subr.mxu0 %v220
      %694 = vmatpush1.msra.mxu0 %v219
      %695 = vmatprep.subr.mxu0 %v188
      %696 = vmatpush1.msra.mxu0 %v187
      %697 = vmatprep.subr.mxu0 %v156
      %698 = vmatpush1.msra.mxu0 %v155
      %699 = vmatprep.subr.mxu0 0.0
      %700 = vmatpush2.msra.mxu0 0.0
      %701 = vmatprep.subr.mxu0 0.0
      %702 = vmatpush2.msra.mxu0 0.0
      %703 = vmatprep.subr.mxu0 0.0
      %704 = vmatpush2.msra.mxu0 0.0
      %705 = vmatprep.subr.mxu0 0.0
      %706 = vmatpush2.msra.mxu0 0.0
      %707 = vmatprep.subr.mxu0 0.0
      %708 = vmatpush2.msra.mxu0 0.0
      %709 = vmatprep.subr.mxu0 0.0
      %710 = vmatpush2.msra.mxu0 0.0
      %711 = vmatprep.subr.mxu0 0.0
      %712 = vmatpush2.msra.mxu0 0.0
      %713 = vmatprep.subr.mxu0 0.0
      %714 = vmatpush2.msra.mxu0 0.0
      %715 = vmatprep.subr.mxu0 0.0
      %716 = vmatpush2.msra.mxu0 0.0
      %717 = vmatprep.subr.mxu0 0.0
      %718 = vmatpush2.msra.mxu0 0.0
      %719 = vmatprep.subr.mxu0 0.0
      %720 = vmatpush2.msra.mxu0 0.0
      %721 = vmatprep.subr.mxu0 0.0
      %722 = vmatpush2.msra.mxu0 0.0
      %723 = vmatprep.subr.mxu0 0.0
      %724 = vmatpush2.msra.mxu0 0.0
      %725 = vmatprep.subr.mxu0 0.0
      %726 = vmatpush2.msra.mxu0 0.0
      %727 = vmatprep.subr.mxu0 0.0
      %728 = vmatpush2.msra.mxu0 0.0
      %729 = vmatprep.subr.mxu0 0.0
      %730 = vmatpush2.msra.mxu0 0.0
      %731 = vmatprep.mubr.f32.mxu0 0.0
      %732 = vmatmul.mubr.f32.gmra.mxu0 %v153
      %v733 = vpop.f32.mrf.mxu0
      %v734 = vadd.f32 0.0, %v733
      %v735 = vpop.f32.mrf.mxu0
      %v736 = vadd.f32 0.0, %v735
      %737 = vmatprep.mubr.f32.mxu0 0.0
      %738 = vmatmul.mubr.f32.gmra.mxu0 %v154
      %v739 = vpop.f32.mrf.mxu0
      %v740 = vadd.f32 0.0, %v739
      %v741 = vpop.f32.mrf.mxu0
      %v742 = vadd.f32 0.0, %v741
      %743 = vdwg.mxu0
      %744 = vmatprep.subr.mxu0 %v638
      %745 = vmatpush1.msra.mxu0 %v637
      %746 = vmatprep.subr.mxu0 %v606
      %747 = vmatpush1.msra.mxu0 %v605
      %748 = vmatprep.subr.mxu0 %v574
      %749 = vmatpush1.msra.mxu0 %v573
      %750 = vmatprep.subr.mxu0 %v542
      %751 = vmatpush1.msra.mxu0 %v541
      %752 = vmatprep.subr.mxu0 %v510
      %753 = vmatpush1.msra.mxu0 %v509
      %754 = vmatprep.subr.mxu0 %v478
      %755 = vmatpush1.msra.mxu0 %v477
      %756 = vmatprep.subr.mxu0 %v446
      %757 = vmatpush1.msra.mxu0 %v445
      %758 = vmatprep.subr.mxu0 %v414
      %759 = vmatpush1.msra.mxu0 %v413
      %760 = vmatprep.subr.mxu0 %v382
      %761 = vmatpush1.msra.mxu0 %v381
      %762 = vmatprep.subr.mxu0 %v350
      %763 = vmatpush1.msra.mxu0 %v349
      %764 = vmatprep.subr.mxu0 %v318
      %765 = vmatpush1.msra.mxu0 %v317
      %766 = vmatprep.subr.mxu0 %v286
      %767 = vmatpush1.msra.mxu0 %v285
      %768 = vmatprep.subr.mxu0 %v254
      %769 = vmatpush1.msra.mxu0 %v253
      %770 = vmatprep.subr.mxu0 %v222
      %771 = vmatpush1.msra.mxu0 %v221
      %772 = vmatprep.subr.mxu0 %v190
      %773 = vmatpush1.msra.mxu0 %v189
      %774 = vmatprep.subr.mxu0 %v158
      %775 = vmatpush1.msra.mxu0 %v157
      %776 = vmatprep.subr.mxu0 0.0
      %777 = vmatpush2.msra.mxu0 0.0
      %778 = vmatprep.subr.mxu0 0.0
      %779 = vmatpush2.msra.mxu0 0.0
      %780 = vmatprep.subr.mxu0 0.0
      %781 = vmatpush2.msra.mxu0 0.0
      %782 = vmatprep.subr.mxu0 0.0
      %783 = vmatpush2.msra.mxu0 0.0
      %784 = vmatprep.subr.mxu0 0.0
      %785 = vmatpush2.msra.mxu0 0.0
      %786 = vmatprep.subr.mxu0 0.0
      %787 = vmatpush2.msra.mxu0 0.0
      %788 = vmatprep.subr.mxu0 0.0
      %789 = vmatpush2.msra.mxu0 0.0
      %790 = vmatprep.subr.mxu0 0.0
      %791 = vmatpush2.msra.mxu0 0.0
      %792 = vmatprep.subr.mxu0 0.0
      %793 = vmatpush2.msra.mxu0 0.0
      %794 = vmatprep.subr.mxu0 0.0
      %795 = vmatpush2.msra.mxu0 0.0
      %796 = vmatprep.subr.mxu0 0.0
      %797 = vmatpush2.msra.mxu0 0.0
      %798 = vmatprep.subr.mxu0 0.0
      %799 = vmatpush2.msra.mxu0 0.0
      %800 = vmatprep.subr.mxu0 0.0
      %801 = vmatpush2.msra.mxu0 0.0
      %802 = vmatprep.subr.mxu0 0.0
      %803 = vmatpush2.msra.mxu0 0.0
      %804 = vmatprep.subr.mxu0 0.0
      %805 = vmatpush2.msra.mxu0 0.0
      %806 = vmatprep.subr.mxu0 0.0
      %807 = vmatpush2.msra.mxu0 0.0
      %808 = vmatprep.mubr.f32.mxu0 0.0
      %809 = vmatmul.mubr.f32.gmra.mxu0 %v153
      %v810 = vpop.f32.mrf.mxu0
      %v811 = vadd.f32 0.0, %v810
      %v812 = vpop.f32.mrf.mxu0
      %v813 = vadd.f32 0.0, %v812
      %814 = vmatprep.mubr.f32.mxu0 0.0
      %815 = vmatmul.mubr.f32.gmra.mxu0 %v154
      %v816 = vpop.f32.mrf.mxu0
      %v817 = vadd.f32 0.0, %v816
      %v818 = vpop.f32.mrf.mxu0
      %v819 = vadd.f32 0.0, %v818
      %820 = vdwg.mxu0
      %821 = vmatprep.subr.mxu0 %v640
      %822 = vmatpush1.msra.mxu0 %v639
      %823 = vmatprep.subr.mxu0 %v608
      %824 = vmatpush1.msra.mxu0 %v607
      %825 = vmatprep.subr.mxu0 %v576
      %826 = vmatpush1.msra.mxu0 %v575
      %827 = vmatprep.subr.mxu0 %v544
      %828 = vmatpush1.msra.mxu0 %v543
      %829 = vmatprep.subr.mxu0 %v512
      %830 = vmatpush1.msra.mxu0 %v511
      %831 = vmatprep.subr.mxu0 %v480
      %832 = vmatpush1.msra.mxu0 %v479
      %833 = vmatprep.subr.mxu0 %v448
      %834 = vmatpush1.msra.mxu0 %v447
      %835 = vmatprep.subr.mxu0 %v416
      %836 = vmatpush1.msra.mxu0 %v415
      %837 = vmatprep.subr.mxu0 %v384
      %838 = vmatpush1.msra.mxu0 %v383
      %839 = vmatprep.subr.mxu0 %v352
      %840 = vmatpush1.msra.mxu0 %v351
      %841 = vmatprep.subr.mxu0 %v320
      %842 = vmatpush1.msra.mxu0 %v319
      %843 = vmatprep.subr.mxu0 %v288
      %844 = vmatpush1.msra.mxu0 %v287
      %845 = vmatprep.subr.mxu0 %v256
      %846 = vmatpush1.msra.mxu0 %v255
      %847 = vmatprep.subr.mxu0 %v224
      %848 = vmatpush1.msra.mxu0 %v223
      %849 = vmatprep.subr.mxu0 %v192
      %850 = vmatpush1.msra.mxu0 %v191
      %851 = vmatprep.subr.mxu0 %v160
      %852 = vmatpush1.msra.mxu0 %v159
      %853 = vmatprep.subr.mxu0 0.0
      %854 = vmatpush2.msra.mxu0 0.0
      %855 = vmatprep.subr.mxu0 0.0
      %856 = vmatpush2.msra.mxu0 0.0
      %857 = vmatprep.subr.mxu0 0.0
      %858 = vmatpush2.msra.mxu0 0.0
      %859 = vmatprep.subr.mxu0 0.0
      %860 = vmatpush2.msra.mxu0 0.0
      %861 = vmatprep.subr.mxu0 0.0
      %862 = vmatpush2.msra.mxu0 0.0
      %863 = vmatprep.subr.mxu0 0.0
      %864 = vmatpush2.msra.mxu0 0.0
      %865 = vmatprep.subr.mxu0 0.0
      %866 = vmatpush2.msra.mxu0 0.0
      %867 = vmatprep.subr.mxu0 0.0
      %868 = vmatpush2.msra.mxu0 0.0
      %869 = vmatprep.subr.mxu0 0.0
      %870 = vmatpush2.msra.mxu0 0.0
      %871 = vmatprep.subr.mxu0 0.0
      %872 = vmatpush2.msra.mxu0 0.0
      %873 = vmatprep.subr.mxu0 0.0
      %874 = vmatpush2.msra.mxu0 0.0
      %875 = vmatprep.subr.mxu0 0.0
      %876 = vmatpush2.msra.mxu0 0.0
      %877 = vmatprep.subr.mxu0 0.0
      %878 = vmatpush2.msra.mxu0 0.0
      %879 = vmatprep.subr.mxu0 0.0
      %880 = vmatpush2.msra.mxu0 0.0
      %881 = vmatprep.subr.mxu0 0.0
      %882 = vmatpush2.msra.mxu0 0.0
      %883 = vmatprep.subr.mxu0 0.0
      %884 = vmatpush2.msra.mxu0 0.0
      %885 = vmatprep.mubr.f32.mxu0 0.0
      %886 = vmatmul.mubr.f32.gmra.mxu0 %v153
      %v887 = vpop.f32.mrf.mxu0
      %v888 = vadd.f32 0.0, %v887
      %v889 = vpop.f32.mrf.mxu0
      %v890 = vadd.f32 0.0, %v889
      %891 = vmatprep.mubr.f32.mxu0 0.0
      %892 = vmatmul.mubr.f32.gmra.mxu0 %v154
      %v893 = vpop.f32.mrf.mxu0
      %v894 = vadd.f32 0.0, %v893
      %v895 = vpop.f32.mrf.mxu0
      %v896 = vadd.f32 0.0, %v895
      %897 = vdwg.mxu0
      %898 = vmatprep.subr.mxu0 %v642
      %899 = vmatpush1.msra.mxu0 %v641
      %900 = vmatprep.subr.mxu0 %v610
      %901 = vmatpush1.msra.mxu0 %v609
      %902 = vmatprep.subr.mxu0 %v578
      %903 = vmatpush1.msra.mxu0 %v577
      %904 = vmatprep.subr.mxu0 %v546
      %905 = vmatpush1.msra.mxu0 %v545
      %906 = vmatprep.subr.mxu0 %v514
      %907 = vmatpush1.msra.mxu0 %v513
      %908 = vmatprep.subr.mxu0 %v482
      %909 = vmatpush1.msra.mxu0 %v481
      %910 = vmatprep.subr.mxu0 %v450
      %911 = vmatpush1.msra.mxu0 %v449
      %912 = vmatprep.subr.mxu0 %v418
      %913 = vmatpush1.msra.mxu0 %v417
      %914 = vmatprep.subr.mxu0 %v386
      %915 = vmatpush1.msra.mxu0 %v385
      %916 = vmatprep.subr.mxu0 %v354
      %917 = vmatpush1.msra.mxu0 %v353
      %918 = vmatprep.subr.mxu0 %v322
      %919 = vmatpush1.msra.mxu0 %v321
      %920 = vmatprep.subr.mxu0 %v290
      %921 = vmatpush1.msra.mxu0 %v289
      %922 = vmatprep.subr.mxu0 %v258
      %923 = vmatpush1.msra.mxu0 %v257
      %924 = vmatprep.subr.mxu0 %v226
      %925 = vmatpush1.msra.mxu0 %v225
      %926 = vmatprep.subr.mxu0 %v194
      %927 = vmatpush1.msra.mxu0 %v193
      %928 = vmatprep.subr.mxu0 %v162
      %929 = vmatpush1.msra.mxu0 %v161
      %930 = vmatprep.subr.mxu0 0.0
      %931 = vmatpush2.msra.mxu0 0.0
      %932 = vmatprep.subr.mxu0 0.0
      %933 = vmatpush2.msra.mxu0 0.0
      %934 = vmatprep.subr.mxu0 0.0
      %935 = vmatpush2.msra.mxu0 0.0
      %936 = vmatprep.subr.mxu0 0.0
      %937 = vmatpush2.msra.mxu0 0.0
      %938 = vmatprep.subr.mxu0 0.0
      %939 = vmatpush2.msra.mxu0 0.0
      %940 = vmatprep.subr.mxu0 0.0
      %941 = vmatpush2.msra.mxu0 0.0
      %942 = vmatprep.subr.mxu0 0.0
      %943 = vmatpush2.msra.mxu0 0.0
      %944 = vmatprep.subr.mxu0 0.0
      %945 = vmatpush2.msra.mxu0 0.0
      %946 = vmatprep.subr.mxu0 0.0
      %947 = vmatpush2.msra.mxu0 0.0
      %948 = vmatprep.subr.mxu0 0.0
      %949 = vmatpush2.msra.mxu0 0.0
      %950 = vmatprep.subr.mxu0 0.0
      %951 = vmatpush2.msra.mxu0 0.0
      %952 = vmatprep.subr.mxu0 0.0
      %953 = vmatpush2.msra.mxu0 0.0
      %954 = vmatprep.subr.mxu0 0.0
      %955 = vmatpush2.msra.mxu0 0.0
      %956 = vmatprep.subr.mxu0 0.0
      %957 = vmatpush2.msra.mxu0 0.0
      %958 = vmatprep.subr.mxu0 0.0
      %959 = vmatpush2.msra.mxu0 0.0
      %960 = vmatprep.subr.mxu0 0.0
      %961 = vmatpush2.msra.mxu0 0.0
      %962 = vmatprep.mubr.f32.mxu0 0.0
      %963 = vmatmul.mubr.f32.gmra.mxu0 %v153
      %v964 = vpop.f32.mrf.mxu0
      %v965 = vadd.f32 0.0, %v964
      %v966 = vpop.f32.mrf.mxu0
      %v967 = vadd.f32 0.0, %v966
      %968 = vmatprep.mubr.f32.mxu0 0.0
      %969 = vmatmul.mubr.f32.gmra.mxu0 %v154
      %v970 = vpop.f32.mrf.mxu0
      %v971 = vadd.f32 0.0, %v970
      %v972 = vpop.f32.mrf.mxu0
      %v973 = vadd.f32 0.0, %v972
      %974 = vdwg.mxu0
      %975 = vmatprep.subr.mxu0 %v644
      %976 = vmatpush1.msra.mxu0 %v643
      %977 = vmatprep.subr.mxu0 %v612
      %978 = vmatpush1.msra.mxu0 %v611
      %979 = vmatprep.subr.mxu0 %v580
      %980 = vmatpush1.msra.mxu0 %v579
      %981 = vmatprep.subr.mxu0 %v548
      %982 = vmatpush1.msra.mxu0 %v547
      %983 = vmatprep.subr.mxu0 %v516
      %984 = vmatpush1.msra.mxu0 %v515
      %985 = vmatprep.subr.mxu0 %v484
      %986 = vmatpush1.msra.mxu0 %v483
      %987 = vmatprep.subr.mxu0 %v452
      %988 = vmatpush1.msra.mxu0 %v451
      %989 = vmatprep.subr.mxu0 %v420
      %990 = vmatpush1.msra.mxu0 %v419
      %991 = vmatprep.subr.mxu0 %v388
      %992 = vmatpush1.msra.mxu0 %v387
      %993 = vmatprep.subr.mxu0 %v356
      %994 = vmatpush1.msra.mxu0 %v355
      %995 = vmatprep.subr.mxu0 %v324
      %996 = vmatpush1.msra.mxu0 %v323
      %997 = vmatprep.subr.mxu0 %v292
      %998 = vmatpush1.msra.mxu0 %v291
      %999 = vmatprep.subr.mxu0 %v260
      %1000 = vmatpush1.msra.mxu0 %v259
      %1001 = vmatprep.subr.mxu0 %v228
      %1002 = vmatpush1.msra.mxu0 %v227
      %1003 = vmatprep.subr.mxu0 %v196
      %1004 = vmatpush1.msra.mxu0 %v195
      %1005 = vmatprep.subr.mxu0 %v164
      %1006 = vmatpush1.msra.mxu0 %v163
      %1007 = vmatprep.subr.mxu0 0.0
      %1008 = vmatpush2.msra.mxu0 0.0
      %1009 = vmatprep.subr.mxu0 0.0
      %1010 = vmatpush2.msra.mxu0 0.0
      %1011 = vmatprep.subr.mxu0 0.0
      %1012 = vmatpush2.msra.mxu0 0.0
      %1013 = vmatprep.subr.mxu0 0.0
      %1014 = vmatpush2.msra.mxu0 0.0
      %1015 = vmatprep.subr.mxu0 0.0
      %1016 = vmatpush2.msra.mxu0 0.0
      %1017 = vmatprep.subr.mxu0 0.0
      %1018 = vmatpush2.msra.mxu0 0.0
      %1019 = vmatprep.subr.mxu0 0.0
      %1020 = vmatpush2.msra.mxu0 0.0
      %1021 = vmatprep.subr.mxu0 0.0
      %1022 = vmatpush2.msra.mxu0 0.0
      %1023 = vmatprep.subr.mxu0 0.0
      %1024 = vmatpush2.msra.mxu0 0.0
      %1025 = vmatprep.subr.mxu0 0.0
      %1026 = vmatpush2.msra.mxu0 0.0
      %1027 = vmatprep.subr.mxu0 0.0
      %1028 = vmatpush2.msra.mxu0 0.0
      %1029 = vmatprep.subr.mxu0 0.0
      %1030 = vmatpush2.msra.mxu0 0.0
      %1031 = vmatprep.subr.mxu0 0.0
      %1032 = vmatpush2.msra.mxu0 0.0
      %1033 = vmatprep.subr.mxu0 0.0
      %1034 = vmatpush2.msra.mxu0 0.0
      %1035 = vmatprep.subr.mxu0 0.0
      %1036 = vmatpush2.msra.mxu0 0.0
      %1037 = vmatprep.subr.mxu0 0.0
      %1038 = vmatpush2.msra.mxu0 0.0
      %1039 = vmatprep.mubr.f32.mxu0 0.0
      %1040 = vmatmul.mubr.f32.gmra.mxu0 %v153
      %v1041 = vpop.f32.mrf.mxu0
      %v1042 = vadd.f32 0.0, %v1041
      %v1043 = vpop.f32.mrf.mxu0
      %v1044 = vadd.f32 0.0, %v1043
      %1045 = vmatprep.mubr.f32.mxu0 0.0
      %1046 = vmatmul.mubr.f32.gmra.mxu0 %v154
      %v1047 = vpop.f32.mrf.mxu0
      %v1048 = vadd.f32 0.0, %v1047
      %v1049 = vpop.f32.mrf.mxu0
      %v1050 = vadd.f32 0.0, %v1049
      %1051 = vdwg.mxu0
      %1052 = vmatprep.subr.mxu0 %v646
      %1053 = vmatpush1.msra.mxu0 %v645
      %1054 = vmatprep.subr.mxu0 %v614
      %1055 = vmatpush1.msra.mxu0 %v613
      %1056 = vmatprep.subr.mxu0 %v582
      %1057 = vmatpush1.msra.mxu0 %v581
      %1058 = vmatprep.subr.mxu0 %v550
      %1059 = vmatpush1.msra.mxu0 %v549
      %1060 = vmatprep.subr.mxu0 %v518
      %1061 = vmatpush1.msra.mxu0 %v517
      %1062 = vmatprep.subr.mxu0 %v486
      %1063 = vmatpush1.msra.mxu0 %v485
      %1064 = vmatprep.subr.mxu0 %v454
      %1065 = vmatpush1.msra.mxu0 %v453
      %1066 = vmatprep.subr.mxu0 %v422
      %1067 = vmatpush1.msra.mxu0 %v421
      %1068 = vmatprep.subr.mxu0 %v390
      %1069 = vmatpush1.msra.mxu0 %v389
      %1070 = vmatprep.subr.mxu0 %v358
      %1071 = vmatpush1.msra.mxu0 %v357
      %1072 = vmatprep.subr.mxu0 %v326
      %1073 = vmatpush1.msra.mxu0 %v325
      %1074 = vmatprep.subr.mxu0 %v294
      %1075 = vmatpush1.msra.mxu0 %v293
      %1076 = vmatprep.subr.mxu0 %v262
      %1077 = vmatpush1.msra.mxu0 %v261
      %1078 = vmatprep.subr.mxu0 %v230
      %1079 = vmatpush1.msra.mxu0 %v229
      %1080 = vmatprep.subr.mxu0 %v198
      %1081 = vmatpush1.msra.mxu0 %v197
      %1082 = vmatprep.subr.mxu0 %v166
      %1083 = vmatpush1.msra.mxu0 %v165
      %1084 = vmatprep.subr.mxu0 0.0
      %1085 = vmatpush2.msra.mxu0 0.0
      %1086 = vmatprep.subr.mxu0 0.0
      %1087 = vmatpush2.msra.mxu0 0.0
      %1088 = vmatprep.subr.mxu0 0.0
      %1089 = vmatpush2.msra.mxu0 0.0
      %1090 = vmatprep.subr.mxu0 0.0
      %1091 = vmatpush2.msra.mxu0 0.0
      %1092 = vmatprep.subr.mxu0 0.0
      %1093 = vmatpush2.msra.mxu0 0.0
      %1094 = vmatprep.subr.mxu0 0.0
      %1095 = vmatpush2.msra.mxu0 0.0
      %1096 = vmatprep.subr.mxu0 0.0
      %1097 = vmatpush2.msra.mxu0 0.0
      %1098 = vmatprep.subr.mxu0 0.0
      %1099 = vmatpush2.msra.mxu0 0.0
      %1100 = vmatprep.subr.mxu0 0.0
      %1101 = vmatpush2.msra.mxu0 0.0
      %1102 = vmatprep.subr.mxu0 0.0
      %1103 = vmatpush2.msra.mxu0 0.0
      %1104 = vmatprep.subr.mxu0 0.0
      %1105 = vmatpush2.msra.mxu0 0.0
      %1106 = vmatprep.subr.mxu0 0.0
      %1107 = vmatpush2.msra.mxu0 0.0
      %1108 = vmatprep.subr.mxu0 0.0
      %1109 = vmatpush2.msra.mxu0 0.0
      %1110 = vmatprep.subr.mxu0 0.0
      %1111 = vmatpush2.msra.mxu0 0.0
      %1112 = vmatprep.subr.mxu0 0.0
      %1113 = vmatpush2.msra.mxu0 0.0
      %1114 = vmatprep.subr.mxu0 0.0
      %1115 = vmatpush2.msra.mxu0 0.0
      %1116 = vmatprep.mubr.f32.mxu0 0.0
      %1117 = vmatmul.mubr.f32.gmra.mxu0 %v153
      %v1118 = vpop.f32.mrf.mxu0
      %v1119 = vadd.f32 0.0, %v1118
      %v1120 = vpop.f32.mrf.mxu0
      %v1121 = vadd.f32 0.0, %v1120
      %1122 = vmatprep.mubr.f32.mxu0 0.0
      %1123 = vmatmul.mubr.f32.gmra.mxu0 %v154
      %v1124 = vpop.f32.mrf.mxu0
      %v1125 = vadd.f32 0.0, %v1124
      %v1126 = vpop.f32.mrf.mxu0
      %v1127 = vadd.f32 0.0, %v1126
      %1128 = vdwg.mxu0
      %1129 = vmatprep.subr.mxu0 %v648
      %1130 = vmatpush1.msra.mxu0 %v647
      %1131 = vmatprep.subr.mxu0 %v616
      %1132 = vmatpush1.msra.mxu0 %v615
      %1133 = vmatprep.subr.mxu0 %v584
      %1134 = vmatpush1.msra.mxu0 %v583
      %1135 = vmatprep.subr.mxu0 %v552
      %1136 = vmatpush1.msra.mxu0 %v551
      %1137 = vmatprep.subr.mxu0 %v520
      %1138 = vmatpush1.msra.mxu0 %v519
      %1139 = vmatprep.subr.mxu0 %v488
      %1140 = vmatpush1.msra.mxu0 %v487
      %1141 = vmatprep.subr.mxu0 %v456
      %1142 = vmatpush1.msra.mxu0 %v455
      %1143 = vmatprep.subr.mxu0 %v424
      %1144 = vmatpush1.msra.mxu0 %v423
      %1145 = vmatprep.subr.mxu0 %v392
      %1146 = vmatpush1.msra.mxu0 %v391
      %1147 = vmatprep.subr.mxu0 %v360
      %1148 = vmatpush1.msra.mxu0 %v359
      %1149 = vmatprep.subr.mxu0 %v328
      %1150 = vmatpush1.msra.mxu0 %v327
      %1151 = vmatprep.subr.mxu0 %v296
      %1152 = vmatpush1.msra.mxu0 %v295
      %1153 = vmatprep.subr.mxu0 %v264
      %1154 = vmatpush1.msra.mxu0 %v263
      %1155 = vmatprep.subr.mxu0 %v232
      %1156 = vmatpush1.msra.mxu0 %v231
      %1157 = vmatprep.subr.mxu0 %v200
      %1158 = vmatpush1.msra.mxu0 %v199
      %1159 = vmatprep.subr.mxu0 %v168
      %1160 = vmatpush1.msra.mxu0 %v167
      %1161 = vmatprep.subr.mxu0 0.0
      %1162 = vmatpush2.msra.mxu0 0.0
      %1163 = vmatprep.subr.mxu0 0.0
      %1164 = vmatpush2.msra.mxu0 0.0
      %1165 = vmatprep.subr.mxu0 0.0
      %1166 = vmatpush2.msra.mxu0 0.0
      %1167 = vmatprep.subr.mxu0 0.0
      %1168 = vmatpush2.msra.mxu0 0.0
      %1169 = vmatprep.subr.mxu0 0.0
      %1170 = vmatpush2.msra.mxu0 0.0
      %1171 = vmatprep.subr.mxu0 0.0
      %1172 = vmatpush2.msra.mxu0 0.0
      %1173 = vmatprep.subr.mxu0 0.0
      %1174 = vmatpush2.msra.mxu0 0.0
      %1175 = vmatprep.subr.mxu0 0.0
      %1176 = vmatpush2.msra.mxu0 0.0
      %1177 = vmatprep.subr.mxu0 0.0
      %1178 = vmatpush2.msra.mxu0 0.0
      %1179 = vmatprep.subr.mxu0 0.0
      %1180 = vmatpush2.msra.mxu0 0.0
      %1181 = vmatprep.subr.mxu0 0.0
      %1182 = vmatpush2.msra.mxu0 0.0
      %1183 = vmatprep.subr.mxu0 0.0
      %1184 = vmatpush2.msra.mxu0 0.0
      %1185 = vmatprep.subr.mxu0 0.0
      %1186 = vmatpush2.msra.mxu0 0.0
      %1187 = vmatprep.subr.mxu0 0.0
      %1188 = vmatpush2.msra.mxu0 0.0
      %1189 = vmatprep.subr.mxu0 0.0
      %1190 = vmatpush2.msra.mxu0 0.0
      %1191 = vmatprep.subr.mxu0 0.0
      %1192 = vmatpush2.msra.mxu0 0.0
      %1193 = vmatprep.mubr.f32.mxu0 0.0
      %1194 = vmatmul.mubr.f32.gmra.mxu0 %v153
      %v1195 = vpop.f32.mrf.mxu0
      %v1196 = vadd.f32 0.0, %v1195
      %v1197 = vpop.f32.mrf.mxu0
      %v1198 = vadd.f32 0.0, %v1197
      %1199 = vmatprep.mubr.f32.mxu0 0.0
      %1200 = vmatmul.mubr.f32.gmra.mxu0 %v154
      %v1201 = vpop.f32.mrf.mxu0
      %v1202 = vadd.f32 0.0, %v1201
      %v1203 = vpop.f32.mrf.mxu0
      %v1204 = vadd.f32 0.0, %v1203
      %1205 = vdwg.mxu0
      %1206 = vmatprep.subr.mxu0 %v650
      %1207 = vmatpush1.msra.mxu0 %v649
      %1208 = vmatprep.subr.mxu0 %v618
      %1209 = vmatpush1.msra.mxu0 %v617
      %1210 = vmatprep.subr.mxu0 %v586
      %1211 = vmatpush1.msra.mxu0 %v585
      %1212 = vmatprep.subr.mxu0 %v554
      %1213 = vmatpush1.msra.mxu0 %v553
      %1214 = vmatprep.subr.mxu0 %v522
      %1215 = vmatpush1.msra.mxu0 %v521
      %1216 = vmatprep.subr.mxu0 %v490
      %1217 = vmatpush1.msra.mxu0 %v489
      %1218 = vmatprep.subr.mxu0 %v458
      %1219 = vmatpush1.msra.mxu0 %v457
      %1220 = vmatprep.subr.mxu0 %v426
      %1221 = vmatpush1.msra.mxu0 %v425
      %1222 = vmatprep.subr.mxu0 %v394
      %1223 = vmatpush1.msra.mxu0 %v393
      %1224 = vmatprep.subr.mxu0 %v362
      %1225 = vmatpush1.msra.mxu0 %v361
      %1226 = vmatprep.subr.mxu0 %v330
      %1227 = vmatpush1.msra.mxu0 %v329
      %1228 = vmatprep.subr.mxu0 %v298
      %1229 = vmatpush1.msra.mxu0 %v297
      %1230 = vmatprep.subr.mxu0 %v266
      %1231 = vmatpush1.msra.mxu0 %v265
      %1232 = vmatprep.subr.mxu0 %v234
      %1233 = vmatpush1.msra.mxu0 %v233
      %1234 = vmatprep.subr.mxu0 %v202
      %1235 = vmatpush1.msra.mxu0 %v201
      %1236 = vmatprep.subr.mxu0 %v170
      %1237 = vmatpush1.msra.mxu0 %v169
      %1238 = vmatprep.subr.mxu0 0.0
      %1239 = vmatpush2.msra.mxu0 0.0
      %1240 = vmatprep.subr.mxu0 0.0
      %1241 = vmatpush2.msra.mxu0 0.0
      %1242 = vmatprep.subr.mxu0 0.0
      %1243 = vmatpush2.msra.mxu0 0.0
      %1244 = vmatprep.subr.mxu0 0.0
      %1245 = vmatpush2.msra.mxu0 0.0
      %1246 = vmatprep.subr.mxu0 0.0
      %1247 = vmatpush2.msra.mxu0 0.0
      %1248 = vmatprep.subr.mxu0 0.0
      %1249 = vmatpush2.msra.mxu0 0.0
      %1250 = vmatprep.subr.mxu0 0.0
      %1251 = vmatpush2.msra.mxu0 0.0
      %1252 = vmatprep.subr.mxu0 0.0
      %1253 = vmatpush2.msra.mxu0 0.0
      %1254 = vmatprep.subr.mxu0 0.0
      %1255 = vmatpush2.msra.mxu0 0.0
      %1256 = vmatprep.subr.mxu0 0.0
      %1257 = vmatpush2.msra.mxu0 0.0
      %1258 = vmatprep.subr.mxu0 0.0
      %1259 = vmatpush2.msra.mxu0 0.0
      %1260 = vmatprep.subr.mxu0 0.0
      %1261 = vmatpush2.msra.mxu0 0.0
      %1262 = vmatprep.subr.mxu0 0.0
      %1263 = vmatpush2.msra.mxu0 0.0
      %1264 = vmatprep.subr.mxu0 0.0
      %1265 = vmatpush2.msra.mxu0 0.0
      %1266 = vmatprep.subr.mxu0 0.0
      %1267 = vmatpush2.msra.mxu0 0.0
      %1268 = vmatprep.subr.mxu0 0.0
      %1269 = vmatpush2.msra.mxu0 0.0
      %1270 = vmatprep.mubr.f32.mxu0 0.0
      %1271 = vmatmul.mubr.f32.gmra.mxu0 %v153
      %v1272 = vpop.f32.mrf.mxu0
      %v1273 = vadd.f32 0.0, %v1272
      %v1274 = vpop.f32.mrf.mxu0
      %v1275 = vadd.f32 0.0, %v1274
      %1276 = vmatprep.mubr.f32.mxu0 0.0
      %1277 = vmatmul.mubr.f32.gmra.mxu0 %v154
      %v1278 = vpop.f32.mrf.mxu0
      %v1279 = vadd.f32 0.0, %v1278
      %v1280 = vpop.f32.mrf.mxu0
      %v1281 = vadd.f32 0.0, %v1280
      %1282 = vdwg.mxu0
      %1283 = vmatprep.subr.mxu0 %v652
      %1284 = vmatpush1.msra.mxu0 %v651
      %1285 = vmatprep.subr.mxu0 %v620
      %1286 = vmatpush1.msra.mxu0 %v619
      %1287 = vmatprep.subr.mxu0 %v588
      %1288 = vmatpush1.msra.mxu0 %v587
      %1289 = vmatprep.subr.mxu0 %v556
      %1290 = vmatpush1.msra.mxu0 %v555
      %1291 = vmatprep.subr.mxu0 %v524
      %1292 = vmatpush1.msra.mxu0 %v523
      %1293 = vmatprep.subr.mxu0 %v492
      %1294 = vmatpush1.msra.mxu0 %v491
      %1295 = vmatprep.subr.mxu0 %v460
      %1296 = vmatpush1.msra.mxu0 %v459
      %1297 = vmatprep.subr.mxu0 %v428
      %1298 = vmatpush1.msra.mxu0 %v427
      %1299 = vmatprep.subr.mxu0 %v396
      %1300 = vmatpush1.msra.mxu0 %v395
      %1301 = vmatprep.subr.mxu0 %v364
      %1302 = vmatpush1.msra.mxu0 %v363
      %1303 = vmatprep.subr.mxu0 %v332
      %1304 = vmatpush1.msra.mxu0 %v331
      %1305 = vmatprep.subr.mxu0 %v300
      %1306 = vmatpush1.msra.mxu0 %v299
      %1307 = vmatprep.subr.mxu0 %v268
      %1308 = vmatpush1.msra.mxu0 %v267
      %1309 = vmatprep.subr.mxu0 %v236
      %1310 = vmatpush1.msra.mxu0 %v235
      %1311 = vmatprep.subr.mxu0 %v204
      %1312 = vmatpush1.msra.mxu0 %v203
      %1313 = vmatprep.subr.mxu0 %v172
      %1314 = vmatpush1.msra.mxu0 %v171
      %1315 = vmatprep.subr.mxu0 0.0
      %1316 = vmatpush2.msra.mxu0 0.0
      %1317 = vmatprep.subr.mxu0 0.0
      %1318 = vmatpush2.msra.mxu0 0.0
      %1319 = vmatprep.subr.mxu0 0.0
      %1320 = vmatpush2.msra.mxu0 0.0
      %1321 = vmatprep.subr.mxu0 0.0
      %1322 = vmatpush2.msra.mxu0 0.0
      %1323 = vmatprep.subr.mxu0 0.0
      %1324 = vmatpush2.msra.mxu0 0.0
      %1325 = vmatprep.subr.mxu0 0.0
      %1326 = vmatpush2.msra.mxu0 0.0
      %1327 = vmatprep.subr.mxu0 0.0
      %1328 = vmatpush2.msra.mxu0 0.0
      %1329 = vmatprep.subr.mxu0 0.0
      %1330 = vmatpush2.msra.mxu0 0.0
      %1331 = vmatprep.subr.mxu0 0.0
      %1332 = vmatpush2.msra.mxu0 0.0
      %1333 = vmatprep.subr.mxu0 0.0
      %1334 = vmatpush2.msra.mxu0 0.0
      %1335 = vmatprep.subr.mxu0 0.0
      %1336 = vmatpush2.msra.mxu0 0.0
      %1337 = vmatprep.subr.mxu0 0.0
      %1338 = vmatpush2.msra.mxu0 0.0
      %1339 = vmatprep.subr.mxu0 0.0
      %1340 = vmatpush2.msra.mxu0 0.0
      %1341 = vmatprep.subr.mxu0 0.0
      %1342 = vmatpush2.msra.mxu0 0.0
      %1343 = vmatprep.subr.mxu0 0.0
      %1344 = vmatpush2.msra.mxu0 0.0
      %1345 = vmatprep.subr.mxu0 0.0
      %1346 = vmatpush2.msra.mxu0 0.0
      %1347 = vmatprep.mubr.f32.mxu0 0.0
      %1348 = vmatmul.mubr.f32.gmra.mxu0 %v153
      %v1349 = vpop.f32.mrf.mxu0
      %v1350 = vadd.f32 0.0, %v1349
      %v1351 = vpop.f32.mrf.mxu0
      %v1352 = vadd.f32 0.0, %v1351
      %1353 = vmatprep.mubr.f32.mxu0 0.0
      %1354 = vmatmul.mubr.f32.gmra.mxu0 %v154
      %v1355 = vpop.f32.mrf.mxu0
      %v1356 = vadd.f32 0.0, %v1355
      %v1357 = vpop.f32.mrf.mxu0
      %v1358 = vadd.f32 0.0, %v1357
      %1359 = vdwg.mxu0
      %1360 = vmatprep.subr.mxu0 %v654
      %1361 = vmatpush1.msra.mxu0 %v653
      %1362 = vmatprep.subr.mxu0 %v622
      %1363 = vmatpush1.msra.mxu0 %v621
      %1364 = vmatprep.subr.mxu0 %v590
      %1365 = vmatpush1.msra.mxu0 %v589
      %1366 = vmatprep.subr.mxu0 %v558
      %1367 = vmatpush1.msra.mxu0 %v557
      %1368 = vmatprep.subr.mxu0 %v526
      %1369 = vmatpush1.msra.mxu0 %v525
      %1370 = vmatprep.subr.mxu0 %v494
      %1371 = vmatpush1.msra.mxu0 %v493
      %1372 = vmatprep.subr.mxu0 %v462
      %1373 = vmatpush1.msra.mxu0 %v461
      %1374 = vmatprep.subr.mxu0 %v430
      %1375 = vmatpush1.msra.mxu0 %v429
      %1376 = vmatprep.subr.mxu0 %v398
      %1377 = vmatpush1.msra.mxu0 %v397
      %1378 = vmatprep.subr.mxu0 %v366
      %1379 = vmatpush1.msra.mxu0 %v365
      %1380 = vmatprep.subr.mxu0 %v334
      %1381 = vmatpush1.msra.mxu0 %v333
      %1382 = vmatprep.subr.mxu0 %v302
      %1383 = vmatpush1.msra.mxu0 %v301
      %1384 = vmatprep.subr.mxu0 %v270
      %1385 = vmatpush1.msra.mxu0 %v269
      %1386 = vmatprep.subr.mxu0 %v238
      %1387 = vmatpush1.msra.mxu0 %v237
      %1388 = vmatprep.subr.mxu0 %v206
      %1389 = vmatpush1.msra.mxu0 %v205
      %1390 = vmatprep.subr.mxu0 %v174
      %1391 = vmatpush1.msra.mxu0 %v173
      %1392 = vmatprep.subr.mxu0 0.0
      %1393 = vmatpush2.msra.mxu0 0.0
      %1394 = vmatprep.subr.mxu0 0.0
      %1395 = vmatpush2.msra.mxu0 0.0
      %1396 = vmatprep.subr.mxu0 0.0
      %1397 = vmatpush2.msra.mxu0 0.0
      %1398 = vmatprep.subr.mxu0 0.0
      %1399 = vmatpush2.msra.mxu0 0.0
      %1400 = vmatprep.subr.mxu0 0.0
      %1401 = vmatpush2.msra.mxu0 0.0
      %1402 = vmatprep.subr.mxu0 0.0
      %1403 = vmatpush2.msra.mxu0 0.0
      %1404 = vmatprep.subr.mxu0 0.0
      %1405 = vmatpush2.msra.mxu0 0.0
      %1406 = vmatprep.subr.mxu0 0.0
      %1407 = vmatpush2.msra.mxu0 0.0
      %1408 = vmatprep.subr.mxu0 0.0
      %1409 = vmatpush2.msra.mxu0 0.0
      %1410 = vmatprep.subr.mxu0 0.0
      %1411 = vmatpush2.msra.mxu0 0.0
      %1412 = vmatprep.subr.mxu0 0.0
      %1413 = vmatpush2.msra.mxu0 0.0
      %1414 = vmatprep.subr.mxu0 0.0
      %1415 = vmatpush2.msra.mxu0 0.0
      %1416 = vmatprep.subr.mxu0 0.0
      %1417 = vmatpush2.msra.mxu0 0.0
      %1418 = vmatprep.subr.mxu0 0.0
      %1419 = vmatpush2.msra.mxu0 0.0
      %1420 = vmatprep.subr.mxu0 0.0
      %1421 = vmatpush2.msra.mxu0 0.0
      %1422 = vmatprep.subr.mxu0 0.0
      %1423 = vmatpush2.msra.mxu0 0.0
      %1424 = vmatprep.mubr.f32.mxu0 0.0
      %1425 = vmatmul.mubr.f32.gmra.mxu0 %v153
      %v1426 = vpop.f32.mrf.mxu0
      %v1427 = vadd.f32 0.0, %v1426
      %v1428 = vpop.f32.mrf.mxu0
      %v1429 = vadd.f32 0.0, %v1428
      %1430 = vmatprep.mubr.f32.mxu0 0.0
      %1431 = vmatmul.mubr.f32.gmra.mxu0 %v154
      %v1432 = vpop.f32.mrf.mxu0
      %v1433 = vadd.f32 0.0, %v1432
      %v1434 = vpop.f32.mrf.mxu0
      %v1435 = vadd.f32 0.0, %v1434
      %1436 = vdwg.mxu0
      %1437 = vmatprep.subr.mxu0 %v656
      %1438 = vmatpush1.msra.mxu0 %v655
      %1439 = vmatprep.subr.mxu0 %v624
      %1440 = vmatpush1.msra.mxu0 %v623
      %1441 = vmatprep.subr.mxu0 %v592
      %1442 = vmatpush1.msra.mxu0 %v591
      %1443 = vmatprep.subr.mxu0 %v560
      %1444 = vmatpush1.msra.mxu0 %v559
      %1445 = vmatprep.subr.mxu0 %v528
      %1446 = vmatpush1.msra.mxu0 %v527
      %1447 = vmatprep.subr.mxu0 %v496
      %1448 = vmatpush1.msra.mxu0 %v495
      %1449 = vmatprep.subr.mxu0 %v464
      %1450 = vmatpush1.msra.mxu0 %v463
      %1451 = vmatprep.subr.mxu0 %v432
      %1452 = vmatpush1.msra.mxu0 %v431
      %1453 = vmatprep.subr.mxu0 %v400
      %1454 = vmatpush1.msra.mxu0 %v399
      %1455 = vmatprep.subr.mxu0 %v368
      %1456 = vmatpush1.msra.mxu0 %v367
      %1457 = vmatprep.subr.mxu0 %v336
      %1458 = vmatpush1.msra.mxu0 %v335
      %1459 = vmatprep.subr.mxu0 %v304
      %1460 = vmatpush1.msra.mxu0 %v303
      %1461 = vmatprep.subr.mxu0 %v272
      %1462 = vmatpush1.msra.mxu0 %v271
      %1463 = vmatprep.subr.mxu0 %v240
      %1464 = vmatpush1.msra.mxu0 %v239
      %1465 = vmatprep.subr.mxu0 %v208
      %1466 = vmatpush1.msra.mxu0 %v207
      %1467 = vmatprep.subr.mxu0 %v176
      %1468 = vmatpush1.msra.mxu0 %v175
      %1469 = vmatprep.subr.mxu0 0.0
      %1470 = vmatpush2.msra.mxu0 0.0
      %1471 = vmatprep.subr.mxu0 0.0
      %1472 = vmatpush2.msra.mxu0 0.0
      %1473 = vmatprep.subr.mxu0 0.0
      %1474 = vmatpush2.msra.mxu0 0.0
      %1475 = vmatprep.subr.mxu0 0.0
      %1476 = vmatpush2.msra.mxu0 0.0
      %1477 = vmatprep.subr.mxu0 0.0
      %1478 = vmatpush2.msra.mxu0 0.0
      %1479 = vmatprep.subr.mxu0 0.0
      %1480 = vmatpush2.msra.mxu0 0.0
      %1481 = vmatprep.subr.mxu0 0.0
      %1482 = vmatpush2.msra.mxu0 0.0
      %1483 = vmatprep.subr.mxu0 0.0
      %1484 = vmatpush2.msra.mxu0 0.0
      %1485 = vmatprep.subr.mxu0 0.0
      %1486 = vmatpush2.msra.mxu0 0.0
      %1487 = vmatprep.subr.mxu0 0.0
      %1488 = vmatpush2.msra.mxu0 0.0
      %1489 = vmatprep.subr.mxu0 0.0
      %1490 = vmatpush2.msra.mxu0 0.0
      %1491 = vmatprep.subr.mxu0 0.0
      %1492 = vmatpush2.msra.mxu0 0.0
      %1493 = vmatprep.subr.mxu0 0.0
      %1494 = vmatpush2.msra.mxu0 0.0
      %1495 = vmatprep.subr.mxu0 0.0
      %1496 = vmatpush2.msra.mxu0 0.0
      %1497 = vmatprep.subr.mxu0 0.0
      %1498 = vmatpush2.msra.mxu0 0.0
      %1499 = vmatprep.subr.mxu0 0.0
      %1500 = vmatpush2.msra.mxu0 0.0
      %1501 = vmatprep.mubr.f32.mxu0 0.0
      %1502 = vmatmul.mubr.f32.gmra.mxu0 %v153
      %v1503 = vpop.f32.mrf.mxu0
      %v1504 = vadd.f32 0.0, %v1503
      %v1505 = vpop.f32.mrf.mxu0
      %v1506 = vadd.f32 0.0, %v1505
      %1507 = vmatprep.mubr.f32.mxu0 0.0
      %1508 = vmatmul.mubr.f32.gmra.mxu0 %v154
      %v1509 = vpop.f32.mrf.mxu0
      %v1510 = vadd.f32 0.0, %v1509
      %v1511 = vpop.f32.mrf.mxu0
      %v1512 = vadd.f32 0.0, %v1511
      %1513 = vdwg.mxu0
      %1514 = vmatprep.subr.mxu0 %v658
      %1515 = vmatpush1.msra.mxu0 %v657
      %1516 = vmatprep.subr.mxu0 %v626
      %1517 = vmatpush1.msra.mxu0 %v625
      %1518 = vmatprep.subr.mxu0 %v594
      %1519 = vmatpush1.msra.mxu0 %v593
      %1520 = vmatprep.subr.mxu0 %v562
      %1521 = vmatpush1.msra.mxu0 %v561
      %1522 = vmatprep.subr.mxu0 %v530
      %1523 = vmatpush1.msra.mxu0 %v529
      %1524 = vmatprep.subr.mxu0 %v498
      %1525 = vmatpush1.msra.mxu0 %v497
      %1526 = vmatprep.subr.mxu0 %v466
      %1527 = vmatpush1.msra.mxu0 %v465
      %1528 = vmatprep.subr.mxu0 %v434
      %1529 = vmatpush1.msra.mxu0 %v433
      %1530 = vmatprep.subr.mxu0 %v402
      %1531 = vmatpush1.msra.mxu0 %v401
      %1532 = vmatprep.subr.mxu0 %v370
      %1533 = vmatpush1.msra.mxu0 %v369
      %1534 = vmatprep.subr.mxu0 %v338
      %1535 = vmatpush1.msra.mxu0 %v337
      %1536 = vmatprep.subr.mxu0 %v306
      %1537 = vmatpush1.msra.mxu0 %v305
      %1538 = vmatprep.subr.mxu0 %v274
      %1539 = vmatpush1.msra.mxu0 %v273
      %1540 = vmatprep.subr.mxu0 %v242
      %1541 = vmatpush1.msra.mxu0 %v241
      %1542 = vmatprep.subr.mxu0 %v210
      %1543 = vmatpush1.msra.mxu0 %v209
      %1544 = vmatprep.subr.mxu0 %v178
      %1545 = vmatpush1.msra.mxu0 %v177
      %1546 = vmatprep.subr.mxu0 0.0
      %1547 = vmatpush2.msra.mxu0 0.0
      %1548 = vmatprep.subr.mxu0 0.0
      %1549 = vmatpush2.msra.mxu0 0.0
      %1550 = vmatprep.subr.mxu0 0.0
      %1551 = vmatpush2.msra.mxu0 0.0
      %1552 = vmatprep.subr.mxu0 0.0
      %1553 = vmatpush2.msra.mxu0 0.0
      %1554 = vmatprep.subr.mxu0 0.0
      %1555 = vmatpush2.msra.mxu0 0.0
      %1556 = vmatprep.subr.mxu0 0.0
      %1557 = vmatpush2.msra.mxu0 0.0
      %1558 = vmatprep.subr.mxu0 0.0
      %1559 = vmatpush2.msra.mxu0 0.0
      %1560 = vmatprep.subr.mxu0 0.0
      %1561 = vmatpush2.msra.mxu0 0.0
      %1562 = vmatprep.subr.mxu0 0.0
      %1563 = vmatpush2.msra.mxu0 0.0
      %1564 = vmatprep.subr.mxu0 0.0
      %1565 = vmatpush2.msra.mxu0 0.0
      %1566 = vmatprep.subr.mxu0 0.0
      %1567 = vmatpush2.msra.mxu0 0.0
      %1568 = vmatprep.subr.mxu0 0.0
      %1569 = vmatpush2.msra.mxu0 0.0
      %1570 = vmatprep.subr.mxu0 0.0
      %1571 = vmatpush2.msra.mxu0 0.0
      %1572 = vmatprep.subr.mxu0 0.0
      %1573 = vmatpush2.msra.mxu0 0.0
      %1574 = vmatprep.subr.mxu0 0.0
      %1575 = vmatpush2.msra.mxu0 0.0
      %1576 = vmatprep.subr.mxu0 0.0
      %1577 = vmatpush2.msra.mxu0 0.0
      %1578 = vmatprep.mubr.f32.mxu0 0.0
      %1579 = vmatmul.mubr.f32.gmra.mxu0 %v153
      %v1580 = vpop.f32.mrf.mxu0
      %v1581 = vadd.f32 0.0, %v1580
      %v1582 = vpop.f32.mrf.mxu0
      %v1583 = vadd.f32 0.0, %v1582
      %1584 = vmatprep.mubr.f32.mxu0 0.0
      %1585 = vmatmul.mubr.f32.gmra.mxu0 %v154
      %v1586 = vpop.f32.mrf.mxu0
      %v1587 = vadd.f32 0.0, %v1586
      %v1588 = vpop.f32.mrf.mxu0
      %v1589 = vadd.f32 0.0, %v1588
      %1590 = vdwg.mxu0
      %1591 = vmatprep.subr.mxu0 %v660
      %1592 = vmatpush1.msra.mxu0 %v659
      %1593 = vmatprep.subr.mxu0 %v628
      %1594 = vmatpush1.msra.mxu0 %v627
      %1595 = vmatprep.subr.mxu0 %v596
      %1596 = vmatpush1.msra.mxu0 %v595
      %1597 = vmatprep.subr.mxu0 %v564
      %1598 = vmatpush1.msra.mxu0 %v563
      %1599 = vmatprep.subr.mxu0 %v532
      %1600 = vmatpush1.msra.mxu0 %v531
      %1601 = vmatprep.subr.mxu0 %v500
      %1602 = vmatpush1.msra.mxu0 %v499
      %1603 = vmatprep.subr.mxu0 %v468
      %1604 = vmatpush1.msra.mxu0 %v467
      %1605 = vmatprep.subr.mxu0 %v436
      %1606 = vmatpush1.msra.mxu0 %v435
      %1607 = vmatprep.subr.mxu0 %v404
      %1608 = vmatpush1.msra.mxu0 %v403
      %1609 = vmatprep.subr.mxu0 %v372
      %1610 = vmatpush1.msra.mxu0 %v371
      %1611 = vmatprep.subr.mxu0 %v340
      %1612 = vmatpush1.msra.mxu0 %v339
      %1613 = vmatprep.subr.mxu0 %v308
      %1614 = vmatpush1.msra.mxu0 %v307
      %1615 = vmatprep.subr.mxu0 %v276
      %1616 = vmatpush1.msra.mxu0 %v275
      %1617 = vmatprep.subr.mxu0 %v244
      %1618 = vmatpush1.msra.mxu0 %v243
      %1619 = vmatprep.subr.mxu0 %v212
      %1620 = vmatpush1.msra.mxu0 %v211
      %1621 = vmatprep.subr.mxu0 %v180
      %1622 = vmatpush1.msra.mxu0 %v179
      %1623 = vmatprep.subr.mxu0 0.0
      %1624 = vmatpush2.msra.mxu0 0.0
      %1625 = vmatprep.subr.mxu0 0.0
      %1626 = vmatpush2.msra.mxu0 0.0
      %1627 = vmatprep.subr.mxu0 0.0
      %1628 = vmatpush2.msra.mxu0 0.0
      %1629 = vmatprep.subr.mxu0 0.0
      %1630 = vmatpush2.msra.mxu0 0.0
      %1631 = vmatprep.subr.mxu0 0.0
      %1632 = vmatpush2.msra.mxu0 0.0
      %1633 = vmatprep.subr.mxu0 0.0
      %1634 = vmatpush2.msra.mxu0 0.0
      %1635 = vmatprep.subr.mxu0 0.0
      %1636 = vmatpush2.msra.mxu0 0.0
      %1637 = vmatprep.subr.mxu0 0.0
      %1638 = vmatpush2.msra.mxu0 0.0
      %1639 = vmatprep.subr.mxu0 0.0
      %1640 = vmatpush2.msra.mxu0 0.0
      %1641 = vmatprep.subr.mxu0 0.0
      %1642 = vmatpush2.msra.mxu0 0.0
      %1643 = vmatprep.subr.mxu0 0.0
      %1644 = vmatpush2.msra.mxu0 0.0
      %1645 = vmatprep.subr.mxu0 0.0
      %1646 = vmatpush2.msra.mxu0 0.0
      %1647 = vmatprep.subr.mxu0 0.0
      %1648 = vmatpush2.msra.mxu0 0.0
      %1649 = vmatprep.subr.mxu0 0.0
      %1650 = vmatpush2.msra.mxu0 0.0
      %1651 = vmatprep.subr.mxu0 0.0
      %1652 = vmatpush2.msra.mxu0 0.0
      %1653 = vmatprep.subr.mxu0 0.0
      %1654 = vmatpush2.msra.mxu0 0.0
      %1655 = vmatprep.mubr.f32.mxu0 0.0
      %1656 = vmatmul.mubr.f32.gmra.mxu0 %v153
      %v1657 = vpop.f32.mrf.mxu0
      %v1658 = vadd.f32 0.0, %v1657
      %v1659 = vpop.f32.mrf.mxu0
      %v1660 = vadd.f32 0.0, %v1659
      %1661 = vmatprep.mubr.f32.mxu0 0.0
      %1662 = vmatmul.mubr.f32.gmra.mxu0 %v154
      %v1663 = vpop.f32.mrf.mxu0
      %v1664 = vadd.f32 0.0, %v1663
      %v1665 = vpop.f32.mrf.mxu0
      %v1666 = vadd.f32 0.0, %v1665
      %1667 = vdwg.mxu0
      %1668 = vmatprep.subr.mxu0 %v662
      %1669 = vmatpush1.msra.mxu0 %v661
      %1670 = vmatprep.subr.mxu0 %v630
      %1671 = vmatpush1.msra.mxu0 %v629
      %1672 = vmatprep.subr.mxu0 %v598
      %1673 = vmatpush1.msra.mxu0 %v597
      %1674 = vmatprep.subr.mxu0 %v566
      %1675 = vmatpush1.msra.mxu0 %v565
      %1676 = vmatprep.subr.mxu0 %v534
      %1677 = vmatpush1.msra.mxu0 %v533
      %1678 = vmatprep.subr.mxu0 %v502
      %1679 = vmatpush1.msra.mxu0 %v501
      %1680 = vmatprep.subr.mxu0 %v470
      %1681 = vmatpush1.msra.mxu0 %v469
      %1682 = vmatprep.subr.mxu0 %v438
      %1683 = vmatpush1.msra.mxu0 %v437
      %1684 = vmatprep.subr.mxu0 %v406
      %1685 = vmatpush1.msra.mxu0 %v405
      %1686 = vmatprep.subr.mxu0 %v374
      %1687 = vmatpush1.msra.mxu0 %v373
      %1688 = vmatprep.subr.mxu0 %v342
      %1689 = vmatpush1.msra.mxu0 %v341
      %1690 = vmatprep.subr.mxu0 %v310
      %1691 = vmatpush1.msra.mxu0 %v309
      %1692 = vmatprep.subr.mxu0 %v278
      %1693 = vmatpush1.msra.mxu0 %v277
      %1694 = vmatprep.subr.mxu0 %v246
      %1695 = vmatpush1.msra.mxu0 %v245
      %1696 = vmatprep.subr.mxu0 %v214
      %1697 = vmatpush1.msra.mxu0 %v213
      %1698 = vmatprep.subr.mxu0 %v182
      %1699 = vmatpush1.msra.mxu0 %v181
      %1700 = vmatprep.subr.mxu0 0.0
      %1701 = vmatpush2.msra.mxu0 0.0
      %1702 = vmatprep.subr.mxu0 0.0
      %1703 = vmatpush2.msra.mxu0 0.0
      %1704 = vmatprep.subr.mxu0 0.0
      %1705 = vmatpush2.msra.mxu0 0.0
      %1706 = vmatprep.subr.mxu0 0.0
      %1707 = vmatpush2.msra.mxu0 0.0
      %1708 = vmatprep.subr.mxu0 0.0
      %1709 = vmatpush2.msra.mxu0 0.0
      %1710 = vmatprep.subr.mxu0 0.0
      %1711 = vmatpush2.msra.mxu0 0.0
      %1712 = vmatprep.subr.mxu0 0.0
      %1713 = vmatpush2.msra.mxu0 0.0
      %1714 = vmatprep.subr.mxu0 0.0
      %1715 = vmatpush2.msra.mxu0 0.0
      %1716 = vmatprep.subr.mxu0 0.0
      %1717 = vmatpush2.msra.mxu0 0.0
      %1718 = vmatprep.subr.mxu0 0.0
      %1719 = vmatpush2.msra.mxu0 0.0
      %1720 = vmatprep.subr.mxu0 0.0
      %1721 = vmatpush2.msra.mxu0 0.0
      %1722 = vmatprep.subr.mxu0 0.0
      %1723 = vmatpush2.msra.mxu0 0.0
      %1724 = vmatprep.subr.mxu0 0.0
      %1725 = vmatpush2.msra.mxu0 0.0
      %1726 = vmatprep.subr.mxu0 0.0
      %1727 = vmatpush2.msra.mxu0 0.0
      %1728 = vmatprep.subr.mxu0 0.0
      %1729 = vmatpush2.msra.mxu0 0.0
      %1730 = vmatprep.subr.mxu0 0.0
      %1731 = vmatpush2.msra.mxu0 0.0
      %1732 = vmatprep.mubr.f32.mxu0 0.0
      %1733 = vmatmul.mubr.f32.gmra.mxu0 %v153
      %v1734 = vpop.f32.mrf.mxu0
      %v1735 = vadd.f32 0.0, %v1734
      %v1736 = vpop.f32.mrf.mxu0
      %v1737 = vadd.f32 0.0, %v1736
      %1738 = vmatprep.mubr.f32.mxu0 0.0
      %1739 = vmatmul.mubr.f32.gmra.mxu0 %v154
      %v1740 = vpop.f32.mrf.mxu0
      %v1741 = vadd.f32 0.0, %v1740
      %v1742 = vpop.f32.mrf.mxu0
      %v1743 = vadd.f32 0.0, %v1742
      %1744 = vdwg.mxu0
      %1745 = vmatprep.subr.mxu0 %v664
      %1746 = vmatpush1.msra.mxu0 %v663
      %1747 = vmatprep.subr.mxu0 %v632
      %1748 = vmatpush1.msra.mxu0 %v631
      %1749 = vmatprep.subr.mxu0 %v600
      %1750 = vmatpush1.msra.mxu0 %v599
      %1751 = vmatprep.subr.mxu0 %v568
      %1752 = vmatpush1.msra.mxu0 %v567
      %1753 = vmatprep.subr.mxu0 %v536
      %1754 = vmatpush1.msra.mxu0 %v535
      %1755 = vmatprep.subr.mxu0 %v504
      %1756 = vmatpush1.msra.mxu0 %v503
      %1757 = vmatprep.subr.mxu0 %v472
      %1758 = vmatpush1.msra.mxu0 %v471
      %1759 = vmatprep.subr.mxu0 %v440
      %1760 = vmatpush1.msra.mxu0 %v439
      %1761 = vmatprep.subr.mxu0 %v408
      %1762 = vmatpush1.msra.mxu0 %v407
      %1763 = vmatprep.subr.mxu0 %v376
      %1764 = vmatpush1.msra.mxu0 %v375
      %1765 = vmatprep.subr.mxu0 %v344
      %1766 = vmatpush1.msra.mxu0 %v343
      %1767 = vmatprep.subr.mxu0 %v312
      %1768 = vmatpush1.msra.mxu0 %v311
      %1769 = vmatprep.subr.mxu0 %v280
      %1770 = vmatpush1.msra.mxu0 %v279
      %1771 = vmatprep.subr.mxu0 %v248
      %1772 = vmatpush1.msra.mxu0 %v247
      %1773 = vmatprep.subr.mxu0 %v216
      %1774 = vmatpush1.msra.mxu0 %v215
      %1775 = vmatprep.subr.mxu0 %v184
      %1776 = vmatpush1.msra.mxu0 %v183
      %1777 = vmatprep.subr.mxu0 0.0
      %1778 = vmatpush2.msra.mxu0 0.0
      %1779 = vmatprep.subr.mxu0 0.0
      %1780 = vmatpush2.msra.mxu0 0.0
      %1781 = vmatprep.subr.mxu0 0.0
      %1782 = vmatpush2.msra.mxu0 0.0
      %1783 = vmatprep.subr.mxu0 0.0
      %1784 = vmatpush2.msra.mxu0 0.0
      %1785 = vmatprep.subr.mxu0 0.0
      %1786 = vmatpush2.msra.mxu0 0.0
      %1787 = vmatprep.subr.mxu0 0.0
      %1788 = vmatpush2.msra.mxu0 0.0
      %1789 = vmatprep.subr.mxu0 0.0
      %1790 = vmatpush2.msra.mxu0 0.0
      %1791 = vmatprep.subr.mxu0 0.0
      %1792 = vmatpush2.msra.mxu0 0.0
      %1793 = vmatprep.subr.mxu0 0.0
      %1794 = vmatpush2.msra.mxu0 0.0
      %1795 = vmatprep.subr.mxu0 0.0
      %1796 = vmatpush2.msra.mxu0 0.0
      %1797 = vmatprep.subr.mxu0 0.0
      %1798 = vmatpush2.msra.mxu0 0.0
      %1799 = vmatprep.subr.mxu0 0.0
      %1800 = vmatpush2.msra.mxu0 0.0
      %1801 = vmatprep.subr.mxu0 0.0
      %1802 = vmatpush2.msra.mxu0 0.0
      %1803 = vmatprep.subr.mxu0 0.0
      %1804 = vmatpush2.msra.mxu0 0.0
      %1805 = vmatprep.subr.mxu0 0.0
      %1806 = vmatpush2.msra.mxu0 0.0
      %1807 = vmatprep.subr.mxu0 0.0
      %1808 = vmatpush2.msra.mxu0 0.0
      %1809 = vmatprep.mubr.f32.mxu0 0.0
      %1810 = vmatmul.mubr.f32.gmra.mxu0 %v153
      %v1811 = vpop.f32.mrf.mxu0
      %v1812 = vadd.f32 0.0, %v1811
      %v1813 = vpop.f32.mrf.mxu0
      %v1814 = vadd.f32 0.0, %v1813
      %1815 = vmatprep.mubr.f32.mxu0 0.0
      %1816 = vmatmul.mubr.f32.gmra.mxu0 %v154
      %v1817 = vpop.f32.mrf.mxu0
      %v1818 = vadd.f32 0.0, %v1817
      %v1819 = vpop.f32.mrf.mxu0
      %v1820 = vadd.f32 0.0, %v1819
      %1821 = vdwg.mxu0
      %1822 = vmatprep.subr.mxu0 %v666
      %1823 = vmatpush1.msra.mxu0 %v665
      %1824 = vmatprep.subr.mxu0 %v634
      %1825 = vmatpush1.msra.mxu0 %v633
      %1826 = vmatprep.subr.mxu0 %v602
      %1827 = vmatpush1.msra.mxu0 %v601
      %1828 = vmatprep.subr.mxu0 %v570
      %1829 = vmatpush1.msra.mxu0 %v569
      %1830 = vmatprep.subr.mxu0 %v538
      %1831 = vmatpush1.msra.mxu0 %v537
      %1832 = vmatprep.subr.mxu0 %v506
      %1833 = vmatpush1.msra.mxu0 %v505
      %1834 = vmatprep.subr.mxu0 %v474
      %1835 = vmatpush1.msra.mxu0 %v473
      %1836 = vmatprep.subr.mxu0 %v442
      %1837 = vmatpush1.msra.mxu0 %v441
      %1838 = vmatprep.subr.mxu0 %v410
      %1839 = vmatpush1.msra.mxu0 %v409
      %1840 = vmatprep.subr.mxu0 %v378
      %1841 = vmatpush1.msra.mxu0 %v377
      %1842 = vmatprep.subr.mxu0 %v346
      %1843 = vmatpush1.msra.mxu0 %v345
      %1844 = vmatprep.subr.mxu0 %v314
      %1845 = vmatpush1.msra.mxu0 %v313
      %1846 = vmatprep.subr.mxu0 %v282
      %1847 = vmatpush1.msra.mxu0 %v281
      %1848 = vmatprep.subr.mxu0 %v250
      %1849 = vmatpush1.msra.mxu0 %v249
      %1850 = vmatprep.subr.mxu0 %v218
      %1851 = vmatpush1.msra.mxu0 %v217
      %1852 = vmatprep.subr.mxu0 %v186
      %1853 = vmatpush1.msra.mxu0 %v185
      %1854 = vmatprep.subr.mxu0 0.0
      %1855 = vmatpush2.msra.mxu0 0.0
      %1856 = vmatprep.subr.mxu0 0.0
      %1857 = vmatpush2.msra.mxu0 0.0
      %1858 = vmatprep.subr.mxu0 0.0
      %1859 = vmatpush2.msra.mxu0 0.0
      %1860 = vmatprep.subr.mxu0 0.0
      %1861 = vmatpush2.msra.mxu0 0.0
      %1862 = vmatprep.subr.mxu0 0.0
      %1863 = vmatpush2.msra.mxu0 0.0
      %1864 = vmatprep.subr.mxu0 0.0
      %1865 = vmatpush2.msra.mxu0 0.0
      %1866 = vmatprep.subr.mxu0 0.0
      %1867 = vmatpush2.msra.mxu0 0.0
      %1868 = vmatprep.subr.mxu0 0.0
      %1869 = vmatpush2.msra.mxu0 0.0
      %1870 = vmatprep.subr.mxu0 0.0
      %1871 = vmatpush2.msra.mxu0 0.0
      %1872 = vmatprep.subr.mxu0 0.0
      %1873 = vmatpush2.msra.mxu0 0.0
      %1874 = vmatprep.subr.mxu0 0.0
      %1875 = vmatpush2.msra.mxu0 0.0
      %1876 = vmatprep.subr.mxu0 0.0
      %1877 = vmatpush2.msra.mxu0 0.0
      %1878 = vmatprep.subr.mxu0 0.0
      %1879 = vmatpush2.msra.mxu0 0.0
      %1880 = vmatprep.subr.mxu0 0.0
      %1881 = vmatpush2.msra.mxu0 0.0
      %1882 = vmatprep.subr.mxu0 0.0
      %1883 = vmatpush2.msra.mxu0 0.0
      %1884 = vmatprep.subr.mxu0 0.0
      %1885 = vmatpush2.msra.mxu0 0.0
      %1886 = vmatprep.mubr.f32.mxu0 0.0
      %1887 = vmatmul.mubr.f32.gmra.mxu0 %v153
      %v1888 = vpop.f32.mrf.mxu0
      %v1889 = vadd.f32 0.0, %v1888
      %v1890 = vpop.f32.mrf.mxu0
      %v1891 = vadd.f32 0.0, %v1890
      %1892 = vmatprep.mubr.f32.mxu0 0.0
      %1893 = vmatmul.mubr.f32.gmra.mxu0 %v154
      %v1894 = vpop.f32.mrf.mxu0
      %v1895 = vadd.f32 0.0, %v1894
      %v1896 = vpop.f32.mrf.mxu0
      %v1897 = vadd.f32 0.0, %v1896
      %1898 = vdwg.mxu0
      %v1899 = vld [vmem:[#allocation6] sm:$0xff]
      %v1900 = vld [vmem:[#allocation6 + $0x8] sm:$0xff]
      %1902 = vset.pattern.permute.xlu0 0
      %1903 = vperm.xlu0 %1902, %v1899
      %v1904 = vpop.permute.xlu0 %1903
      %1907 = vset.pattern.permute.xlu0 0
      %1908 = vperm.xlu0 %1907, %v1900
      %v1909 = vpop.permute.xlu0 %1908
      %v1911 = vmul.f32 %v1904, %v734
      %v1912 = vmul.f32 %v1909, %v740
      %1913 = vset.pattern.permute.xlu0 1
      %1914 = vperm.xlu0 %1913, %v1899
      %v1915 = vpop.permute.xlu0 %1914
      %1917 = vset.pattern.permute.xlu0 1
      %1918 = vperm.xlu0 %1917, %v1900
      %v1919 = vpop.permute.xlu0 %1918
      %v1921 = vmul.f32 %v1915, %v736
      %v1922 = vmul.f32 %v1919, %v742
      %v1923 = vadd.f32 %v1911, %v1921
      %v1924 = vadd.f32 %v1912, %v1922
      %1925 = vset.pattern.permute.xlu0 2
      %1926 = vperm.xlu0 %1925, %v1899
      %v1927 = vpop.permute.xlu0 %1926
      %1929 = vset.pattern.permute.xlu0 2
      %1930 = vperm.xlu0 %1929, %v1900
      %v1931 = vpop.permute.xlu0 %1930
      %v1933 = vmul.f32 %v1927, %v811
      %v1934 = vmul.f32 %v1931, %v817
      %v1935 = vadd.f32 %v1923, %v1933
      %v1936 = vadd.f32 %v1924, %v1934
      %1937 = vset.pattern.permute.xlu0 3
      %1938 = vperm.xlu0 %1937, %v1899
      %v1939 = vpop.permute.xlu0 %1938
      %1941 = vset.pattern.permute.xlu0 3
      %1942 = vperm.xlu0 %1941, %v1900
      %v1943 = vpop.permute.xlu0 %1942
      %v1945 = vmul.f32 %v1939, %v813
      %v1946 = vmul.f32 %v1943, %v819
      %v1947 = vadd.f32 %v1935, %v1945
      %v1948 = vadd.f32 %v1936, %v1946
      %1949 = vset.pattern.permute.xlu0 4
      %1950 = vperm.xlu0 %1949, %v1899
      %v1951 = vpop.permute.xlu0 %1950
      %1953 = vset.pattern.permute.xlu0 4
      %1954 = vperm.xlu0 %1953, %v1900
      %v1955 = vpop.permute.xlu0 %1954
      %v1957 = vmul.f32 %v1951, %v888
      %v1958 = vmul.f32 %v1955, %v894
      %v1959 = vadd.f32 %v1947, %v1957
      %v1960 = vadd.f32 %v1948, %v1958
      %1961 = vset.pattern.permute.xlu0 5
      %1962 = vperm.xlu0 %1961, %v1899
      %v1963 = vpop.permute.xlu0 %1962
      %1965 = vset.pattern.permute.xlu0 5
      %1966 = vperm.xlu0 %1965, %v1900
      %v1967 = vpop.permute.xlu0 %1966
      %v1969 = vmul.f32 %v1963, %v890
      %v1970 = vmul.f32 %v1967, %v896
      %v1971 = vadd.f32 %v1959, %v1969
      %v1972 = vadd.f32 %v1960, %v1970
      %1973 = vset.pattern.permute.xlu0 6
      %1974 = vperm.xlu0 %1973, %v1899
      %v1975 = vpop.permute.xlu0 %1974
      %1977 = vset.pattern.permute.xlu0 6
      %1978 = vperm.xlu0 %1977, %v1900
      %v1979 = vpop.permute.xlu0 %1978
      %v1981 = vmul.f32 %v1975, %v965
      %v1982 = vmul.f32 %v1979, %v971
      %v1983 = vadd.f32 %v1971, %v1981
      %v1984 = vadd.f32 %v1972, %v1982
      %1985 = vset.pattern.permute.xlu0 7
      %1986 = vperm.xlu0 %1985, %v1899
      %v1987 = vpop.permute.xlu0 %1986
      %1989 = vset.pattern.permute.xlu0 7
      %1990 = vperm.xlu0 %1989, %v1900
      %v1991 = vpop.permute.xlu0 %1990
      %v1993 = vmul.f32 %v1987, %v967
      %v1994 = vmul.f32 %v1991, %v973
      %v1995 = vadd.f32 %v1983, %v1993
      %v1996 = vadd.f32 %v1984, %v1994
      %1997 = vset.pattern.permute.xlu0 8
      %1998 = vperm.xlu0 %1997, %v1899
      %v1999 = vpop.permute.xlu0 %1998
      %2001 = vset.pattern.permute.xlu0 8
      %2002 = vperm.xlu0 %2001, %v1900
      %v2003 = vpop.permute.xlu0 %2002
      %v2005 = vmul.f32 %v1999, %v1042
      %v2006 = vmul.f32 %v2003, %v1048
      %v2007 = vadd.f32 %v1995, %v2005
      %v2008 = vadd.f32 %v1996, %v2006
      %2009 = vset.pattern.permute.xlu0 9
      %2010 = vperm.xlu0 %2009, %v1899
      %v2011 = vpop.permute.xlu0 %2010
      %2013 = vset.pattern.permute.xlu0 9
      %2014 = vperm.xlu0 %2013, %v1900
      %v2015 = vpop.permute.xlu0 %2014
      %v2017 = vmul.f32 %v2011, %v1044
      %v2018 = vmul.f32 %v2015, %v1050
      %v2019 = vadd.f32 %v2007, %v2017
      %v2020 = vadd.f32 %v2008, %v2018
      %2021 = vset.pattern.permute.xlu0 10
      %2022 = vperm.xlu0 %2021, %v1899
      %v2023 = vpop.permute.xlu0 %2022
      %2025 = vset.pattern.permute.xlu0 10
      %2026 = vperm.xlu0 %2025, %v1900
      %v2027 = vpop.permute.xlu0 %2026
      %v2029 = vmul.f32 %v2023, %v1119
      %v2030 = vmul.f32 %v2027, %v1125
      %v2031 = vadd.f32 %v2019, %v2029
      %v2032 = vadd.f32 %v2020, %v2030
      %2033 = vset.pattern.permute.xlu0 11
      %2034 = vperm.xlu0 %2033, %v1899
      %v2035 = vpop.permute.xlu0 %2034
      %2037 = vset.pattern.permute.xlu0 11
      %2038 = vperm.xlu0 %2037, %v1900
      %v2039 = vpop.permute.xlu0 %2038
      %v2041 = vmul.f32 %v2035, %v1121
      %v2042 = vmul.f32 %v2039, %v1127
      %v2043 = vadd.f32 %v2031, %v2041
      %v2044 = vadd.f32 %v2032, %v2042
      %2045 = vset.pattern.permute.xlu0 12
      %2046 = vperm.xlu0 %2045, %v1899
      %v2047 = vpop.permute.xlu0 %2046
      %2049 = vset.pattern.permute.xlu0 12
      %2050 = vperm.xlu0 %2049, %v1900
      %v2051 = vpop.permute.xlu0 %2050
      %v2053 = vmul.f32 %v2047, %v1196
      %v2054 = vmul.f32 %v2051, %v1202
      %v2055 = vadd.f32 %v2043, %v2053
      %v2056 = vadd.f32 %v2044, %v2054
      %2057 = vset.pattern.permute.xlu0 13
      %2058 = vperm.xlu0 %2057, %v1899
      %v2059 = vpop.permute.xlu0 %2058
      %2061 = vset.pattern.permute.xlu0 13
      %2062 = vperm.xlu0 %2061, %v1900
      %v2063 = vpop.permute.xlu0 %2062
      %v2065 = vmul.f32 %v2059, %v1198
      %v2066 = vmul.f32 %v2063, %v1204
      %v2067 = vadd.f32 %v2055, %v2065
      %v2068 = vadd.f32 %v2056, %v2066
      %2069 = vset.pattern.permute.xlu0 14
      %2070 = vperm.xlu0 %2069, %v1899
      %v2071 = vpop.permute.xlu0 %2070
      %2073 = vset.pattern.permute.xlu0 14
      %2074 = vperm.xlu0 %2073, %v1900
      %v2075 = vpop.permute.xlu0 %2074
      %v2077 = vmul.f32 %v2071, %v1273
      %v2078 = vmul.f32 %v2075, %v1279
      %v2079 = vadd.f32 %v2067, %v2077
      %v2080 = vadd.f32 %v2068, %v2078
      %2081 = vset.pattern.permute.xlu0 15
      %2082 = vperm.xlu0 %2081, %v1899
      %v2083 = vpop.permute.xlu0 %2082
      %2085 = vset.pattern.permute.xlu0 15
      %2086 = vperm.xlu0 %2085, %v1900
      %v2087 = vpop.permute.xlu0 %2086
      %v2089 = vmul.f32 %v2083, %v1275
      %v2090 = vmul.f32 %v2087, %v1281
      %v2091 = vadd.f32 %v2079, %v2089
      %v2092 = vadd.f32 %v2080, %v2090
      %2093 = vset.pattern.permute.xlu0 16
      %2094 = vperm.xlu0 %2093, %v1899
      %v2095 = vpop.permute.xlu0 %2094
      %2097 = vset.pattern.permute.xlu0 16
      %2098 = vperm.xlu0 %2097, %v1900
      %v2099 = vpop.permute.xlu0 %2098
      %v2101 = vmul.f32 %v2095, %v1350
      %v2102 = vmul.f32 %v2099, %v1356
      %v2103 = vadd.f32 %v2091, %v2101
      %v2104 = vadd.f32 %v2092, %v2102
      %2105 = vset.pattern.permute.xlu0 17
      %2106 = vperm.xlu0 %2105, %v1899
      %v2107 = vpop.permute.xlu0 %2106
      %2109 = vset.pattern.permute.xlu0 17
      %2110 = vperm.xlu0 %2109, %v1900
      %v2111 = vpop.permute.xlu0 %2110
      %v2113 = vmul.f32 %v2107, %v1352
      %v2114 = vmul.f32 %v2111, %v1358
      %v2115 = vadd.f32 %v2103, %v2113
      %v2116 = vadd.f32 %v2104, %v2114
      %2117 = vset.pattern.permute.xlu0 18
      %2118 = vperm.xlu0 %2117, %v1899
      %v2119 = vpop.permute.xlu0 %2118
      %2121 = vset.pattern.permute.xlu0 18
      %2122 = vperm.xlu0 %2121, %v1900
      %v2123 = vpop.permute.xlu0 %2122
      %v2125 = vmul.f32 %v2119, %v1427
      %v2126 = vmul.f32 %v2123, %v1433
      %v2127 = vadd.f32 %v2115, %v2125
      %v2128 = vadd.f32 %v2116, %v2126
      %2129 = vset.pattern.permute.xlu0 19
      %2130 = vperm.xlu0 %2129, %v1899
      %v2131 = vpop.permute.xlu0 %2130
      %2133 = vset.pattern.permute.xlu0 19
      %2134 = vperm.xlu0 %2133, %v1900
      %v2135 = vpop.permute.xlu0 %2134
      %v2137 = vmul.f32 %v2131, %v1429
      %v2138 = vmul.f32 %v2135, %v1435
      %v2139 = vadd.f32 %v2127, %v2137
      %v2140 = vadd.f32 %v2128, %v2138
      %2141 = vset.pattern.permute.xlu0 20
      %2142 = vperm.xlu0 %2141, %v1899
      %v2143 = vpop.permute.xlu0 %2142
      %2145 = vset.pattern.permute.xlu0 20
      %2146 = vperm.xlu0 %2145, %v1900
      %v2147 = vpop.permute.xlu0 %2146
      %v2149 = vmul.f32 %v2143, %v1504
      %v2150 = vmul.f32 %v2147, %v1510
      %v2151 = vadd.f32 %v2139, %v2149
      %v2152 = vadd.f32 %v2140, %v2150
      %2153 = vset.pattern.permute.xlu0 21
      %2154 = vperm.xlu0 %2153, %v1899
      %v2155 = vpop.permute.xlu0 %2154
      %2157 = vset.pattern.permute.xlu0 21
      %2158 = vperm.xlu0 %2157, %v1900
      %v2159 = vpop.permute.xlu0 %2158
      %v2161 = vmul.f32 %v2155, %v1506
      %v2162 = vmul.f32 %v2159, %v1512
      %v2163 = vadd.f32 %v2151, %v2161
      %v2164 = vadd.f32 %v2152, %v2162
      %2165 = vset.pattern.permute.xlu0 22
      %2166 = vperm.xlu0 %2165, %v1899
      %v2167 = vpop.permute.xlu0 %2166
      %2169 = vset.pattern.permute.xlu0 22
      %2170 = vperm.xlu0 %2169, %v1900
      %v2171 = vpop.permute.xlu0 %2170
      %v2173 = vmul.f32 %v2167, %v1581
      %v2174 = vmul.f32 %v2171, %v1587
      %v2175 = vadd.f32 %v2163, %v2173
      %v2176 = vadd.f32 %v2164, %v2174
      %2177 = vset.pattern.permute.xlu0 23
      %2178 = vperm.xlu0 %2177, %v1899
      %v2179 = vpop.permute.xlu0 %2178
      %2181 = vset.pattern.permute.xlu0 23
      %2182 = vperm.xlu0 %2181, %v1900
      %v2183 = vpop.permute.xlu0 %2182
      %v2185 = vmul.f32 %v2179, %v1583
      %v2186 = vmul.f32 %v2183, %v1589
      %v2187 = vadd.f32 %v2175, %v2185
      %v2188 = vadd.f32 %v2176, %v2186
      %2189 = vset.pattern.permute.xlu0 24
      %2190 = vperm.xlu0 %2189, %v1899
      %v2191 = vpop.permute.xlu0 %2190
      %2193 = vset.pattern.permute.xlu0 24
      %2194 = vperm.xlu0 %2193, %v1900
      %v2195 = vpop.permute.xlu0 %2194
      %v2197 = vmul.f32 %v2191, %v1658
      %v2198 = vmul.f32 %v2195, %v1664
      %v2199 = vadd.f32 %v2187, %v2197
      %v2200 = vadd.f32 %v2188, %v2198
      %2201 = vset.pattern.permute.xlu0 25
      %2202 = vperm.xlu0 %2201, %v1899
      %v2203 = vpop.permute.xlu0 %2202
      %2205 = vset.pattern.permute.xlu0 25
      %2206 = vperm.xlu0 %2205, %v1900
      %v2207 = vpop.permute.xlu0 %2206
      %v2209 = vmul.f32 %v2203, %v1660
      %v2210 = vmul.f32 %v2207, %v1666
      %v2211 = vadd.f32 %v2199, %v2209
      %v2212 = vadd.f32 %v2200, %v2210
      %2213 = vset.pattern.permute.xlu0 26
      %2214 = vperm.xlu0 %2213, %v1899
      %v2215 = vpop.permute.xlu0 %2214
      %2217 = vset.pattern.permute.xlu0 26
      %2218 = vperm.xlu0 %2217, %v1900
      %v2219 = vpop.permute.xlu0 %2218
      %v2221 = vmul.f32 %v2215, %v1735
      %v2222 = vmul.f32 %v2219, %v1741
      %v2223 = vadd.f32 %v2211, %v2221
      %v2224 = vadd.f32 %v2212, %v2222
      %2225 = vset.pattern.permute.xlu0 27
      %2226 = vperm.xlu0 %2225, %v1899
      %v2227 = vpop.permute.xlu0 %2226
      %2229 = vset.pattern.permute.xlu0 27
      %2230 = vperm.xlu0 %2229, %v1900
      %v2231 = vpop.permute.xlu0 %2230
      %v2233 = vmul.f32 %v2227, %v1737
      %v2234 = vmul.f32 %v2231, %v1743
      %v2235 = vadd.f32 %v2223, %v2233
      %v2236 = vadd.f32 %v2224, %v2234
      %2237 = vset.pattern.permute.xlu0 28
      %2238 = vperm.xlu0 %2237, %v1899
      %v2239 = vpop.permute.xlu0 %2238
      %2241 = vset.pattern.permute.xlu0 28
      %2242 = vperm.xlu0 %2241, %v1900
      %v2243 = vpop.permute.xlu0 %2242
      %v2245 = vmul.f32 %v2239, %v1812
      %v2246 = vmul.f32 %v2243, %v1818
      %v2247 = vadd.f32 %v2235, %v2245
      %v2248 = vadd.f32 %v2236, %v2246
      %2249 = vset.pattern.permute.xlu0 29
      %2250 = vperm.xlu0 %2249, %v1899
      %v2251 = vpop.permute.xlu0 %2250
      %2253 = vset.pattern.permute.xlu0 29
      %2254 = vperm.xlu0 %2253, %v1900
      %v2255 = vpop.permute.xlu0 %2254
      %v2257 = vmul.f32 %v2251, %v1814
      %v2258 = vmul.f32 %v2255, %v1820
      %v2259 = vadd.f32 %v2247, %v2257
      %v2260 = vadd.f32 %v2248, %v2258
      %2261 = vset.pattern.permute.xlu0 30
      %2262 = vperm.xlu0 %2261, %v1899
      %v2263 = vpop.permute.xlu0 %2262
      %2265 = vset.pattern.permute.xlu0 30
      %2266 = vperm.xlu0 %2265, %v1900
      %v2267 = vpop.permute.xlu0 %2266
      %v2269 = vmul.f32 %v2263, %v1889
      %v2270 = vmul.f32 %v2267, %v1895
      %v2271 = vadd.f32 %v2259, %v2269
      %v2272 = vadd.f32 %v2260, %v2270
      %2273 = vset.pattern.permute.xlu0 31
      %2274 = vperm.xlu0 %2273, %v1899
      %v2275 = vpop.permute.xlu0 %2274
      %2277 = vset.pattern.permute.xlu0 31
      %2278 = vperm.xlu0 %2277, %v1900
      %v2279 = vpop.permute.xlu0 %2278
      %v2281 = vmul.f32 %v2275, %v1891
      %v2282 = vmul.f32 %v2279, %v1897
      %v2283 = vadd.f32 %v2271, %v2281
      %v2284 = vadd.f32 %v2272, %v2282
      %v2285 = vld [vmem:[#allocation12] sm:$0x1]
      %v2287 = vlaneseq
      %v2288 = vshrl.u32 %v2287, 7
      %v2289 = vsub.s32 0, %v2288
      %v2290 = vrot.slane %v2285, %v2289
      %v2292 = vmul.f32 %v2283, %v2290
      %v2293 = vmul.f32 %v2284, %v2290
      %v2294 = vld [vmem:[#allocation14] sm:$0x1]
      %v2296 = vlaneseq
      %v2297 = vshrl.u32 %v2296, 7
      %v2298 = vsub.s32 0, %v2297
      %v2299 = vrot.slane %v2294, %v2298
      %v2301 = vadd.f32 %v2292, %v2299
      %v2302 = vadd.f32 %v2293, %v2299
      %2303 = vst [vmem:[#allocation2] sm:$0xff] %v2301
      %2304 = vst [vmem:[#allocation2 + $0x8] sm:$0xff] %v2302
    $region69: #{tpu_custom_call.1} parent=1 // pred_fallthru
      _
    %v2305 = vld [vmem:[#allocation2] sm:$0xff]
    %v2306 = vld [vmem:[#allocation2 + $0x8] sm:$0xff]
    %v2307 = vld [vmem:[#allocation15] sm:$0xff]
    %v2308 = vld [vmem:[#allocation15 + $0x8] sm:$0xff]
    %v2309 = vld [vmem:[#allocation15 + $0x10] sm:$0xff]
    %v2310 = vld [vmem:[#allocation15 + $0x18] sm:$0xff]
    %v2311 = vld [vmem:[#allocation15 + $0x20] sm:$0xff]
    %v2312 = vld [vmem:[#allocation15 + $0x28] sm:$0xff]
    %v2313 = vld [vmem:[#allocation15 + $0x30] sm:$0xff]
    %v2314 = vld [vmem:[#allocation15 + $0x38] sm:$0xff]
    %v2315 = vld [vmem:[#allocation15 + $0x40] sm:$0xff]
    %v2316 = vld [vmem:[#allocation15 + $0x48] sm:$0xff]
    %v2317 = vld [vmem:[#allocation15 + $0x50] sm:$0xff]
    %v2318 = vld [vmem:[#allocation15 + $0x58] sm:$0xff]
    %v2319 = vld [vmem:[#allocation15 + $0x60] sm:$0xff]
    %v2320 = vld [vmem:[#allocation15 + $0x68] sm:$0xff]
    %v2321 = vld [vmem:[#allocation15 + $0x70] sm:$0xff]
    %v2322 = vld [vmem:[#allocation15 + $0x78] sm:$0xff]
    %v2323 = vld [vmem:[#allocation15 + $0x80] sm:$0xff]
    %v2324 = vld [vmem:[#allocation15 + $0x88] sm:$0xff]
    %v2325 = vld [vmem:[#allocation15 + $0x90] sm:$0xff]
    %v2326 = vld [vmem:[#allocation15 + $0x98] sm:$0xff]
    %v2327 = vld [vmem:[#allocation15 + $0xa0] sm:$0xff]
    %v2328 = vld [vmem:[#allocation15 + $0xa8] sm:$0xff]
    %v2329 = vld [vmem:[#allocation15 + $0xb0] sm:$0xff]
    %v2330 = vld [vmem:[#allocation15 + $0xb8] sm:$0xff]
    %v2331 = vld [vmem:[#allocation15 + $0xc0] sm:$0xff]
    %v2332 = vld [vmem:[#allocation15 + $0xc8] sm:$0xff]
    %v2333 = vld [vmem:[#allocation15 + $0xd0] sm:$0xff]
    %v2334 = vld [vmem:[#allocation15 + $0xd8] sm:$0xff]
    %v2335 = vld [vmem:[#allocation15 + $0xe0] sm:$0xff]
    %v2336 = vld [vmem:[#allocation15 + $0xe8] sm:$0xff]
    %v2337 = vld [vmem:[#allocation15 + $0xf0] sm:$0xff]
    %v2338 = vld [vmem:[#allocation15 + $0xf8] sm:$0xff]
    %2339 = vmatprep.subr.mxu0 %v2338
    %2340 = vmatpush1.msra.mxu0 %v2337
    %2341 = vmatprep.subr.mxu0 %v2336
    %2342 = vmatpush1.msra.mxu0 %v2335
    %2343 = vmatprep.subr.mxu0 %v2334
    %2344 = vmatpush1.msra.mxu0 %v2333
    %2345 = vmatprep.subr.mxu0 %v2332
    %2346 = vmatpush1.msra.mxu0 %v2331
    %2347 = vmatprep.subr.mxu0 %v2330
    %2348 = vmatpush1.msra.mxu0 %v2329
    %2349 = vmatprep.subr.mxu0 %v2328
    %2350 = vmatpush1.msra.mxu0 %v2327
    %2351 = vmatprep.subr.mxu0 %v2326
    %2352 = vmatpush1.msra.mxu0 %v2325
    %2353 = vmatprep.subr.mxu0 %v2324
    %2354 = vmatpush1.msra.mxu0 %v2323
    %2355 = vmatprep.subr.mxu0 %v2322
    %2356 = vmatpush1.msra.mxu0 %v2321
    %2357 = vmatprep.subr.mxu0 %v2320
    %2358 = vmatpush1.msra.mxu0 %v2319
    %2359 = vmatprep.subr.mxu0 %v2318
    %2360 = vmatpush1.msra.mxu0 %v2317
    %2361 = vmatprep.subr.mxu0 %v2316
    %2362 = vmatpush1.msra.mxu0 %v2315
    %2363 = vmatprep.subr.mxu0 %v2314
    %2364 = vmatpush1.msra.mxu0 %v2313
    %2365 = vmatprep.subr.mxu0 %v2312
    %2366 = vmatpush1.msra.mxu0 %v2311
    %2367 = vmatprep.subr.mxu0 %v2310
    %2368 = vmatpush1.msra.mxu0 %v2309
    %2369 = vmatprep.subr.mxu0 %v2308
    %2370 = vmatpush1.msra.mxu0 %v2307
    %2371 = vmatprep.subr.mxu0 0.0
    %2372 = vmatpush2.msra.mxu0 0.0
    %2373 = vmatprep.subr.mxu0 0.0
    %2374 = vmatpush2.msra.mxu0 0.0
    %2375 = vmatprep.subr.mxu0 0.0
    %2376 = vmatpush2.msra.mxu0 0.0
    %2377 = vmatprep.subr.mxu0 0.0
    %2378 = vmatpush2.msra.mxu0 0.0
    %2379 = vmatprep.subr.mxu0 0.0
    %2380 = vmatpush2.msra.mxu0 0.0
    %2381 = vmatprep.subr.mxu0 0.0
    %2382 = vmatpush2.msra.mxu0 0.0
    %2383 = vmatprep.subr.mxu0 0.0
    %2384 = vmatpush2.msra.mxu0 0.0
    %2385 = vmatprep.subr.mxu0 0.0
    %2386 = vmatpush2.msra.mxu0 0.0
    %2387 = vmatprep.subr.mxu0 0.0
    %2388 = vmatpush2.msra.mxu0 0.0
    %2389 = vmatprep.subr.mxu0 0.0
    %2390 = vmatpush2.msra.mxu0 0.0
    %2391 = vmatprep.subr.mxu0 0.0
    %2392 = vmatpush2.msra.mxu0 0.0
    %2393 = vmatprep.subr.mxu0 0.0
    %2394 = vmatpush2.msra.mxu0 0.0
    %2395 = vmatprep.subr.mxu0 0.0
    %2396 = vmatpush2.msra.mxu0 0.0
    %2397 = vmatprep.subr.mxu0 0.0
    %2398 = vmatpush2.msra.mxu0 0.0
    %2399 = vmatprep.subr.mxu0 0.0
    %2400 = vmatpush2.msra.mxu0 0.0
    %2401 = vmatprep.subr.mxu0 0.0
    %2402 = vmatpush2.msra.mxu0 0.0
    %2403 = vmatprep.mubr.f32.mxu0 0.0
    %2404 = vmatmul.mubr.f32.gmra.mxu0 %v2305
    %v2405 = vpop.f32.mrf.mxu0
    %v2406 = vadd.f32 0.0, %v2405
    %v2407 = vpop.f32.mrf.mxu0
    %v2408 = vadd.f32 0.0, %v2407
    %2409 = vmatprep.mubr.f32.mxu0 0.0
    %2410 = vmatmul.mubr.f32.gmra.mxu0 %v2306
    %v2411 = vpop.f32.mrf.mxu0
    %v2412 = vadd.f32 0.0, %v2411
    %v2413 = vpop.f32.mrf.mxu0
    %v2414 = vadd.f32 0.0, %v2413
    %2415 = vdwg.mxu0
    %v2416 = vsub.f32 0.0, %v2406
    %v2417 = vsub.f32 0.0, %v2408
    %v2418 = vsub.f32 0.0, %v2412
    %v2419 = vsub.f32 0.0, %v2414
    %v2420 = vmul.f32 %v2416, 1.442695
    %v2421 = vpow.pop %v2420
    %v2422 = vmul.f32 %v2417, 1.442695
    %v2423 = vpow.pop %v2422
    %v2424 = vmul.f32 %v2418, 1.442695
    %v2425 = vpow.pop %v2424
    %v2426 = vmul.f32 %v2419, 1.442695
    %v2427 = vpow.pop %v2426
    %v2428 = vadd.f32 %v2421, 1.0
    %v2429 = vadd.f32 %v2423, 1.0
    %v2430 = vadd.f32 %v2425, 1.0
    %v2431 = vadd.f32 %v2427, 1.0
    %v2432 = vrcp.pop %v2428
    %v2433 = vmul.f32 1.0, %v2432
    %v2434 = vrcp.pop %v2429
    %v2435 = vmul.f32 1.0, %v2434
    %v2436 = vrcp.pop %v2430
    %v2437 = vmul.f32 1.0, %v2436
    %v2438 = vrcp.pop %v2431
    %v2439 = vmul.f32 1.0, %v2438
    %2440 = vst [vmem:[#allocation17] sm:$0xff] %v2433
    %2441 = vst [vmem:[#allocation17 + $0x8] sm:$0xff] %v2435
    %2442 = vst [vmem:[#allocation17 + $0x10] sm:$0xff] %v2437
    %2443 = vst [vmem:[#allocation17 + $0x18] sm:$0xff] %v2439
    // Predicated region
    $region70: #{tpu_custom_call.1} parent=1 // pred_check
      _
    $region71: #{tpu_custom_call.1} parent=1 // pred_check_branch
      %2445 = sbr.rel (0) target = $region73
    $region72: #{tpu_custom_call.1} parent=1 // pred_region
      %s2447 = ssub.s32 512, 512
      %2448 = vsyncadd [#allocation5], %s2447
      %s2449 = sshll.u32 [#allocation17], 4
      %s2450 = int_to_ptr.vmem [resolvable:$true] %s2449
      %2455 = dma.vmem_to_hbm [thread:$0]  %s2450, 512, %s8, [#allocation5], 256, 256, 16
    $region73: #{tpu_custom_call.1} parent=1 // pred_fallthru
      _
    // Predicated region
    $region74: #{tpu_custom_call.1} parent=1 // pred_check
      _
    $region75: #{tpu_custom_call.1} parent=1 // pred_check_branch
      %2457 = sbr.rel (0) target = $region77
    $region76: #{tpu_custom_call.1} parent=1 // pred_region
      %2458 = dma.done [#allocation5], 512
    $region77: #{tpu_custom_call.1} parent=1 // pred_fallthru
      _
    %2459 = vsyncpa [#allocation4], 1
    %2460 = vsyncpa [#allocation7], 1
    %2461 = vsyncpa [#allocation10], 1
    %2462 = vsyncpa [#allocation13], 1
    %2463 = vsyncpa [#allocation16], 1
    %2464 = vsyncpa [#allocation5], 1

</llo_original>
